<compile_context>
chip_gen: v6e
topology: v6e:2x2x1
jax: 0.10.0
libtpu: 0.0.40
codegen_flags: <defaults>
</compile_context>

<pallas_src>
import jax
import jax.numpy as jnp
from jax.experimental import pallas as pl
from jax.experimental.pallas import tpu as pltpu

DIMENSION = 1
HIDDEN = 64
LANE = 128


def _softplus(z):
    # PyTorch nn.Softplus(beta=1): log(1 + exp(z)).  Stable form with fewer
    # VPU ops than jnp.logaddexp(z, 0):  max(z, 0) + log1p(exp(-|z|)).
    return jnp.maximum(z, 0.0) + jnp.log1p(jnp.exp(-jnp.abs(z)))


def _round_up(n, m):
    return ((n + m - 1) // m) * m


def hnn_kernel(s_ref, w1_ref, b1_ref, w2_ref, b2_ref, w3_ref, b3_ref, out_ref):
    """One batch tile, computed transposed: features on sublanes, batch on lanes."""
    hi = jax.lax.Precision.HIGHEST

    # Layer 1: [HIDDEN, 2*DIM] @ [2*DIM, TILE_B] on the MXU (K is tiny, MXU is idle).
    h = jnp.dot(w1_ref[...], s_ref[...],
                preferred_element_type=jnp.float32, precision=hi) + b1_ref[...]
    h = _softplus(h)                                       # [HIDDEN, TILE_B]

    # Layer 2: [HIDDEN, HIDDEN] @ [HIDDEN, TILE_B], true-f32 accumulate.
    h = jnp.dot(w2_ref[...], h,
                preferred_element_type=jnp.float32, precision=hi) + b2_ref[...]
    h = _softplus(h)                                       # [HIDDEN, TILE_B]

    # Layer 3: [1, HIDDEN] @ [HIDDEN, TILE_B] -> lane-dense [1, TILE_B] output.
    out = jnp.dot(w3_ref[...], h,
                  preferred_element_type=jnp.float32, precision=hi) + b3_ref[...]
    out_ref[...] = out.astype(out_ref.dtype)


def hamiltonian_nn_forward(x, p, params, *, tile_b=4096):
    """x: [B, DIM], p: [B, DIM] -> [B, 1].  params are in PyTorch Linear layout."""
    w1, b1, w2, b2, w3, b3 = params            # w: [out, in], b: [out]
    B, dim = x.shape
    assert p.shape == (B, dim)

    # Batch lives on the lane axis inside the kernel.
    b_lane = _round_up(B, LANE)
    tile_b = max(LANE, min(_round_up(tile_b, LANE), b_lane))
    # Keep at least 2 grid steps when there is enough work so the "parallel"
    # batch axis can be sharded across both v7x TensorCores (harmless on v5e/v6e).
    if b_lane >= 2 * LANE and b_lane // tile_b < 2:
        tile_b = max(LANE, _round_up((b_lane + 1) // 2, LANE))
    Bp = _round_up(B, tile_b)
    grid_b = Bp // tile_b

    # Pack (x, p) once host-side -> a single [2*DIM, Bp] input (one DMA stream
    # per step; also what the layer-1 MXU matmul consumes directly).
    state = jnp.concatenate([x, p], axis=-1).astype(jnp.float32)      # [B, 2*DIM]
    stateT = jnp.pad(state, ((0, Bp - B), (0, 0))).T                  # [2*DIM, Bp]

    # Parameters reshaped for the transposed (feature-major) compute.
    w1f = w1.astype(jnp.float32)                        # [HIDDEN, 2*DIM]
    b1c = b1.reshape(HIDDEN, 1).astype(jnp.float32)
    w2f = w2.astype(jnp.float32)                        # [HIDDEN, HIDDEN]
    b2c = b2.reshape(HIDDEN, 1).astype(jnp.float32)
    w3r = w3.reshape(1, HIDDEN).astype(jnp.float32)     # torch [1, HIDDEN] row
    b3c = b3.reshape(1, 1).astype(jnp.float32)

    resident = lambda shape: pl.BlockSpec(shape, lambda i: (0,) * len(shape))

    n_params = w1.size + b1.size + w2.size + b2.size + w3.size + b3.size
    cost = pl.CostEstimate(
        flops=2 * B * (2 * dim * HIDDEN + HIDDEN * HIDDEN + HIDDEN),
        transcendentals=2 * B * HIDDEN * 2,             # two softplus layers (exp + log)
        bytes_accessed=4 * (B * (2 * dim + 1) + n_params),
    )

    out_pad = pl.pallas_call(
        hnn_kernel,
        out_shape=jax.ShapeDtypeStruct((1, Bp), jnp.float32),
        grid=(grid_b,),
        in_specs=[
            pl.BlockSpec((2 * dim, tile_b), lambda i: (0, i)),   # packed state: per-tile DMA
            resident((HIDDEN, 2 * dim)),    # w1  : VMEM-resident
            resident((HIDDEN, 1)),          # b1
            resident((HIDDEN, HIDDEN)),     # w2
            resident((HIDDEN, 1)),          # b2
            resident((1, HIDDEN)),          # w3 (row)
            resident((1, 1)),               # b3
        ],
        out_specs=pl.BlockSpec((1, tile_b), lambda i: (0, i)),
        compiler_params=pltpu.CompilerParams(
            dimension_semantics=("parallel",),      # shard batch tiles across TCs
            vmem_limit_bytes=32 << 20,              # headroom for large tiles on v5e
        ),
        cost_estimate=cost,
    )(stateT, w1f, b1c, w2f, b2c, w3r, b3c)

    return out_pad[0, :B].reshape(B, 1)


def init_params(key, dim):
    """Deterministic init mirroring nn.Linear (PyTorch layout: W [out, in], b [out])."""
    ks = jax.random.split(key, 6)

    def linear(kw, kb, fan_in, fan_out):
        bound = 1.0 / jnp.sqrt(fan_in)
        w = jax.random.uniform(kw, (fan_out, fan_in), jnp.float32, -bound, bound)
        b = jax.random.uniform(kb, (fan_out,), jnp.float32, -bound, bound)
        return w, b

    w1, b1 = linear(ks[0], ks[1], 2 * dim, HIDDEN)
    w2, b2 = linear(ks[2], ks[3], HIDDEN, HIDDEN)
    w3, b3 = linear(ks[4], ks[5], HIDDEN, 1)
    return (w1, b1, w2, b2, w3, b3)


def reference_forward(x, p, params):
    """Pure-JAX fp32 reference (HIGHEST matmul precision = true f32)."""
    w1, b1, w2, b2, w3, b3 = params
    hi = jax.lax.Precision.HIGHEST
    s = jnp.concatenate([x, p], axis=-1)
    h = jax.nn.softplus(jnp.dot(s, w1.T, precision=hi) + b1)
    h = jax.nn.softplus(jnp.dot(h, w2.T, precision=hi) + b2)
    return jnp.dot(h, w3.T, precision=hi) + b3


if __name__ == "__main__":
    key = jax.random.PRNGKey(0)
    kx, kp, kparam = jax.random.split(key, 3)
    params = init_params(kparam, DIMENSION)

    # Small primary test (matches the module's intended usage scale).
    B = 8
    x = jax.random.normal(kx, (B, DIMENSION), jnp.float32)
    p = jax.random.normal(kp, (B, DIMENSION), jnp.float32)
    out = jax.block_until_ready(hamiltonian_nn_forward(x, p, params))
    ref = reference_forward(x, p, params)
    assert out.shape == (B, 1)
    assert jnp.allclose(out, ref, atol=1e-5, rtol=1e-5)

    # Second check exercising batch padding and a multi-step ("parallel") grid.
    B2 = 384
    x2 = jax.random.normal(jax.random.PRNGKey(1), (B2, DIMENSION), jnp.float32)
    p2 = jax.random.normal(jax.random.PRNGKey(2), (B2, DIMENSION), jnp.float32)
    out2 = jax.block_until_ready(hamiltonian_nn_forward(x2, p2, params))
    ref2 = reference_forward(x2, p2, params)
    assert out2.shape == (B2, 1)
    assert jnp.allclose(out2, ref2, atol=1e-5, rtol=1e-5)

    print("KERNEL_OK")
</pallas_src>

<mosaic_0001>
module attributes {stable_mosaic.version = 11 : i64} {
  func.func @hnn_kernel(%arg0: i32, %arg1: memref<2x128xf32, #tpu.memory_space<vmem>>, %arg2: memref<64x2xf32, #tpu.memory_space<vmem>>, %arg3: memref<64x1xf32, #tpu.memory_space<vmem>>, %arg4: memref<64x64xf32, #tpu.memory_space<vmem>>, %arg5: memref<64x1xf32, #tpu.memory_space<vmem>>, %arg6: memref<1x64xf32, #tpu.memory_space<vmem>>, %arg7: memref<1x1xf32, #tpu.memory_space<vmem>>, %arg8: memref<1x128xf32, #tpu.memory_space<vmem>>) attributes {dimension_semantics = [#tpu.dimension_semantics<parallel>], iteration_bounds = array<i64: 1>, scalar_prefetch = 0 : i64, scratch_operands = 0 : i64, tpu.core_type = #tpu.core_type<tc>, window_params = [{transform_indices = @transform_0, window_bounds = array<i64: 2, 128>}, {pipeline_mode = #tpu.pipeline_mode<synchronous>, transform_indices = @transform_1, window_bounds = array<i64: 64, 2>}, {pipeline_mode = #tpu.pipeline_mode<synchronous>, transform_indices = @transform_2, window_bounds = array<i64: 64, 1>}, {pipeline_mode = #tpu.pipeline_mode<synchronous>, transform_indices = @transform_3, window_bounds = array<i64: 64, 64>}, {pipeline_mode = #tpu.pipeline_mode<synchronous>, transform_indices = @transform_4, window_bounds = array<i64: 64, 1>}, {pipeline_mode = #tpu.pipeline_mode<synchronous>, transform_indices = @transform_5, window_bounds = array<i64: 1, 64>}, {pipeline_mode = #tpu.pipeline_mode<synchronous>, transform_indices = @transform_6, window_bounds = array<i64: 1, 1>}, {transform_indices = @transform_7, window_bounds = array<i64: 1, 128>}]} {
    %c0 = arith.constant 0 : index
    %c0_0 = arith.constant 0 : index
    %0 = vector.load %arg2[%c0, %c0_0] : memref<64x2xf32, #tpu.memory_space<vmem>>, vector<64x2xf32>
    %c0_1 = arith.constant 0 : index
    %c0_2 = arith.constant 0 : index
    %1 = vector.load %arg1[%c0_1, %c0_2] : memref<2x128xf32, #tpu.memory_space<vmem>>, vector<2x128xf32>
    %cst = arith.constant dense<0.000000e+00> : vector<64x128xf32>
    %2 = tpu.matmul %0, %1, %cst {dimension_numbers = #tpu.dot_dimension_numbers<[1], [0], [0], [1], [0, 0, 1, 1], [], []>, precision = #tpu.contract_precision<fp32>} : vector<64x2xf32>, vector<2x128xf32>, vector<64x128xf32> -> vector<64x128xf32>
    %c0_3 = arith.constant 0 : index
    %c0_4 = arith.constant 0 : index
    %3 = vector.load %arg3[%c0_3, %c0_4] : memref<64x1xf32, #tpu.memory_space<vmem>>, vector<64x1xf32>
    %4 = vector.broadcast %3 : vector<64x1xf32> to vector<64x128xf32>
    %5 = arith.addf %2, %4 : vector<64x128xf32>
    %cst_5 = arith.constant 0.000000e+00 : f32
    %6 = vector.broadcast %cst_5 : f32 to vector<64x128xf32>
    %7 = arith.maximumf %5, %6 : vector<64x128xf32>
    %8 = math.absf %5 : vector<64x128xf32>
    %cst_6 = arith.constant 0.000000e+00 : f32
    %9 = vector.broadcast %cst_6 : f32 to vector<64x128xf32>
    %10 = arith.subf %9, %8 : vector<64x128xf32>
    %11 = math.exp %10 : vector<64x128xf32>
    %12 = math.log1p %11 : vector<64x128xf32>
    %13 = arith.addf %7, %12 : vector<64x128xf32>
    %c0_7 = arith.constant 0 : index
    %c0_8 = arith.constant 0 : index
    %14 = vector.load %arg4[%c0_7, %c0_8] : memref<64x64xf32, #tpu.memory_space<vmem>>, vector<64x64xf32>
    %cst_9 = arith.constant dense<0.000000e+00> : vector<64x128xf32>
    %15 = tpu.matmul %14, %13, %cst_9 {dimension_numbers = #tpu.dot_dimension_numbers<[1], [0], [0], [1], [0, 0, 1, 1], [], []>, precision = #tpu.contract_precision<fp32>} : vector<64x64xf32>, vector<64x128xf32>, vector<64x128xf32> -> vector<64x128xf32>
    %c0_10 = arith.constant 0 : index
    %c0_11 = arith.constant 0 : index
    %16 = vector.load %arg5[%c0_10, %c0_11] : memref<64x1xf32, #tpu.memory_space<vmem>>, vector<64x1xf32>
    %17 = vector.broadcast %16 : vector<64x1xf32> to vector<64x128xf32>
    %18 = arith.addf %15, %17 : vector<64x128xf32>
    %cst_12 = arith.constant 0.000000e+00 : f32
    %19 = vector.broadcast %cst_12 : f32 to vector<64x128xf32>
    %20 = arith.maximumf %18, %19 : vector<64x128xf32>
    %21 = math.absf %18 : vector<64x128xf32>
    %cst_13 = arith.constant 0.000000e+00 : f32
    %22 = vector.broadcast %cst_13 : f32 to vector<64x128xf32>
    %23 = arith.subf %22, %21 : vector<64x128xf32>
    %24 = math.exp %23 : vector<64x128xf32>
    %25 = math.log1p %24 : vector<64x128xf32>
    %26 = arith.addf %20, %25 : vector<64x128xf32>
    %c0_14 = arith.constant 0 : index
    %c0_15 = arith.constant 0 : index
    %27 = vector.load %arg6[%c0_14, %c0_15] : memref<1x64xf32, #tpu.memory_space<vmem>>, vector<1x64xf32>
    %cst_16 = arith.constant dense<0.000000e+00> : vector<1x128xf32>
    %28 = tpu.matmul %27, %26, %cst_16 {dimension_numbers = #tpu.dot_dimension_numbers<[1], [0], [0], [1], [0, 0, 1, 1], [], []>, precision = #tpu.contract_precision<fp32>} : vector<1x64xf32>, vector<64x128xf32>, vector<1x128xf32> -> vector<1x128xf32>
    %c0_17 = arith.constant 0 : index
    %c0_18 = arith.constant 0 : index
    %29 = vector.load %arg7[%c0_17, %c0_18] : memref<1x1xf32, #tpu.memory_space<vmem>>, vector<1x1xf32>
    %30 = vector.broadcast %29 : vector<1x1xf32> to vector<1x128xf32>
    %31 = arith.addf %28, %30 : vector<1x128xf32>
    %c0_19 = arith.constant 0 : index
    %c0_20 = arith.constant 0 : index
    %32 = vector.load %arg8[%c0_19, %c0_20] : memref<1x128xf32, #tpu.memory_space<vmem>>, vector<1x128xf32>
    tpu.vector_store %arg8[%c0_19, %c0_20], %31 {strides = array<i32>} : memref<1x128xf32, #tpu.memory_space<vmem>>, vector<1x128xf32>,
    return
  }
  func.func @transform_0(%arg0: i32) -> (i32, i32) {
    %c0_i32 = arith.constant 0 : i32
    %c0_i32_0 = arith.constant 0 : i32
    return %c0_i32, %arg0 : i32, i32
  }
  func.func @transform_1(%arg0: i32) -> (i32, i32) {
    %c0_i32 = arith.constant 0 : i32
    %c0_i32_0 = arith.constant 0 : i32
    %c0_i32_1 = arith.constant 0 : i32
    return %c0_i32, %c0_i32_0 : i32, i32
  }
  func.func @transform_2(%arg0: i32) -> (i32, i32) {
    %c0_i32 = arith.constant 0 : i32
    %c0_i32_0 = arith.constant 0 : i32
    %c0_i32_1 = arith.constant 0 : i32
    return %c0_i32, %c0_i32_0 : i32, i32
  }
  func.func @transform_3(%arg0: i32) -> (i32, i32) {
    %c0_i32 = arith.constant 0 : i32
    %c0_i32_0 = arith.constant 0 : i32
    %c0_i32_1 = arith.constant 0 : i32
    return %c0_i32, %c0_i32_0 : i32, i32
  }
  func.func @transform_4(%arg0: i32) -> (i32, i32) {
    %c0_i32 = arith.constant 0 : i32
    %c0_i32_0 = arith.constant 0 : i32
    %c0_i32_1 = arith.constant 0 : i32
    return %c0_i32, %c0_i32_0 : i32, i32
  }
  func.func @transform_5(%arg0: i32) -> (i32, i32) {
    %c0_i32 = arith.constant 0 : i32
    %c0_i32_0 = arith.constant 0 : i32
    %c0_i32_1 = arith.constant 0 : i32
    return %c0_i32, %c0_i32_0 : i32, i32
  }
  func.func @transform_6(%arg0: i32) -> (i32, i32) {
    %c0_i32 = arith.constant 0 : i32
    %c0_i32_0 = arith.constant 0 : i32
    %c0_i32_1 = arith.constant 0 : i32
    return %c0_i32, %c0_i32_0 : i32, i32
  }
  func.func @transform_7(%arg0: i32) -> (i32, i32) {
    %c0_i32 = arith.constant 0 : i32
    %c0_i32_0 = arith.constant 0 : i32
    return %c0_i32, %arg0 : i32, i32
  }
}

</mosaic_0001>

<llo_original>
// kernel: tpu_custom_call.1
$region0: #{tpu_custom_call.1}
  #allocation0 [shape = 'u32[]', space=smem, size = 0x4, offset = 0x4, fixed_abs, tag = 'smem constant byte address 0x4 - core index']
  #allocation1 [shape = 'u32[144,128]{1,0:T(1,128)}', space=vmem, size = 0x12000, scoped, tag = 'internal scratch']
  #allocation2 [shape = 'f32[1,1]{1,0:T(1,128)S(1)}', space=vmem, size = 0x200, scoped, tag = 'scoped memory for tpu_custom_call.1']
  %s0 = inlined_call_operand.vmem [shape: f32[2,128], index: 0, kind: input, shape index: {}]
  %s1 = inlined_call_operand.vmem [shape: f32[64,2], index: 1, kind: input, shape index: {}]
  %s2 = inlined_call_operand.vmem [shape: f32[64,1], index: 2, kind: input, shape index: {}]
  %s3 = inlined_call_operand.vmem [shape: f32[64,64], index: 3, kind: input, shape index: {}]
  %s4 = inlined_call_operand.vmem [shape: f32[64,1], index: 4, kind: input, shape index: {}]
  %s5 = inlined_call_operand.vmem [shape: f32[1,64], index: 5, kind: input, shape index: {}]
  %s6 = inlined_call_operand.<no memory space> [shape: f32[1,1], index: 6, kind: input, shape index: {}]
  %s7 = inlined_call_operand.hbm [shape: f32[1,128], index: 7, kind: output, shape index: {}]
  %s8 = sld [smem:[#allocation0]]
  $region38: #{tpu_custom_call.1} parent=0
    _
  %s10 = ssub.s32 1, %s8
  %s11 = scalar_select 0, %s10, %s8
  %v12 = vstv %s6
  %13 = vst [vmem:[#allocation2] sm:$0x1] %v12
  $region1: #{tpu_custom_call.1} parent=0
    #allocation3 [shape = 'u8[512]{0}', space=vmem, size = 0x400, scoped, tag = 'output window, operand 0, single buffered']
    #allocation4 [shape = 's32[1]{0}', space=sflag, size = 0x4, scoped, tag = 'scoped memory for tpu_custom_call.1']
    %14 = vsyncpa [#allocation4], 0
    // Predicated region
    $region2: #{tpu_custom_call.1} parent=1 // pred_check
      _
    $region3: #{tpu_custom_call.1} parent=1 // pred_check_branch
      %16 = sbr.rel (0) target = $region5
    $region4: #{tpu_custom_call.1} parent=1 // pred_region
      _
    $region5: #{tpu_custom_call.1} parent=1 // pred_fallthru
      _
    // Predicated region
    $region6: #{tpu_custom_call.1} parent=1 // pred_check
      _
    $region7: #{tpu_custom_call.1} parent=1 // pred_check_branch
      %18 = sbr.rel (0) target = $region9
    $region8: #{tpu_custom_call.1} parent=1 // pred_region
      _
    $region9: #{tpu_custom_call.1} parent=1 // pred_fallthru
      _
    // Predicated region
    $region10: #{tpu_custom_call.1} parent=1 // pred_check
      _
    $region11: #{tpu_custom_call.1} parent=1 // pred_check_branch
      %20 = sbr.rel (0) target = $region13
    $region12: #{tpu_custom_call.1} parent=1 // pred_region
      _
    $region13: #{tpu_custom_call.1} parent=1 // pred_fallthru
      _
    // Predicated region
    $region14: #{tpu_custom_call.1} parent=1 // pred_check
      _
    $region15: #{tpu_custom_call.1} parent=1 // pred_check_branch
      %22 = sbr.rel (0) target = $region17
    $region16: #{tpu_custom_call.1} parent=1 // pred_region
      _
    $region17: #{tpu_custom_call.1} parent=1 // pred_fallthru
      _
    // Predicated region
    $region18: #{tpu_custom_call.1} parent=1 // pred_check
      _
    $region19: #{tpu_custom_call.1} parent=1 // pred_check_branch
      %24 = sbr.rel (0) target = $region21
    $region20: #{tpu_custom_call.1} parent=1 // pred_region
      _
    $region21: #{tpu_custom_call.1} parent=1 // pred_fallthru
      _
    // Predicated region
    $region22: #{tpu_custom_call.1} parent=1 // pred_check
      _
    $region23: #{tpu_custom_call.1} parent=1 // pred_check_branch
      %26 = sbr.rel (0) target = $region25
    $region24: #{tpu_custom_call.1} parent=1 // pred_region
      _
    $region25: #{tpu_custom_call.1} parent=1 // pred_fallthru
      _
    // Predicated region
    $region26: #{tpu_custom_call.1} parent=1 // pred_check
      _
    $region27: #{tpu_custom_call.1} parent=1 // pred_check_branch
      %28 = sbr.rel (0) target = $region29
    $region28: #{tpu_custom_call.1} parent=1 // pred_region
      _
    $region29: #{tpu_custom_call.1} parent=1 // pred_fallthru
      _
    %v29 = vld [vmem:[%s1] sm:$0xff]
    %v30 = vld [vmem:[%s1 + $0x8] sm:$0xff]
    %v31 = vld [vmem:[%s1 + $0x10] sm:$0xff]
    %v32 = vld [vmem:[%s1 + $0x18] sm:$0xff]
    %v33 = vld [vmem:[%s1 + $0x20] sm:$0xff]
    %v34 = vld [vmem:[%s1 + $0x28] sm:$0xff]
    %v35 = vld [vmem:[%s1 + $0x30] sm:$0xff]
    %v36 = vld [vmem:[%s1 + $0x38] sm:$0xff]
    %v37 = vld [vmem:[%s0] sm:$0x3]
    %v38 = vld [vmem:[%s2] sm:$0xff]
    %v39 = vld [vmem:[%s2 + $0x8] sm:$0xff]
    %v40 = vld [vmem:[%s2 + $0x10] sm:$0xff]
    %v41 = vld [vmem:[%s2 + $0x18] sm:$0xff]
    %v42 = vld [vmem:[%s2 + $0x20] sm:$0xff]
    %v43 = vld [vmem:[%s2 + $0x28] sm:$0xff]
    %v44 = vld [vmem:[%s2 + $0x30] sm:$0xff]
    %v45 = vld [vmem:[%s2 + $0x38] sm:$0xff]
    %47 = vset.pattern.permute.xlu0 0
    %48 = vperm.xlu0 %47, %v38
    %v49 = vpop.permute.xlu0 %48
    %52 = vset.pattern.permute.xlu0 0
    %53 = vperm.xlu0 %52, %v39
    %v54 = vpop.permute.xlu0 %53
    %57 = vset.pattern.permute.xlu0 0
    %58 = vperm.xlu0 %57, %v40
    %v59 = vpop.permute.xlu0 %58
    %62 = vset.pattern.permute.xlu0 0
    %63 = vperm.xlu0 %62, %v41
    %v64 = vpop.permute.xlu0 %63
    %67 = vset.pattern.permute.xlu0 0
    %68 = vperm.xlu0 %67, %v42
    %v69 = vpop.permute.xlu0 %68
    %72 = vset.pattern.permute.xlu0 0
    %73 = vperm.xlu0 %72, %v43
    %v74 = vpop.permute.xlu0 %73
    %77 = vset.pattern.permute.xlu0 0
    %78 = vperm.xlu0 %77, %v44
    %v79 = vpop.permute.xlu0 %78
    %82 = vset.pattern.permute.xlu0 0
    %83 = vperm.xlu0 %82, %v45
    %v84 = vpop.permute.xlu0 %83
    %vm86 = vcmask 15360
    %v88 = vsel %vm86, %v29, 0
    %v91 = vsel %vm86, %v30, 0
    %v94 = vsel %vm86, %v31, 0
    %v97 = vsel %vm86, %v32, 0
    %v100 = vsel %vm86, %v33, 0
    %v103 = vsel %vm86, %v34, 0
    %v106 = vsel %vm86, %v35, 0
    %v109 = vsel %vm86, %v36, 0
    %vm111 = vcmask 1041408
    %v113 = vsel %vm111, %v37, 0
    %115 = vmatprep.subr.mxu0 0.0
    %116 = vmatpush1.msra.mxu0 0.0
    %117 = vmatprep.subr.mxu0 0.0
    %118 = vmatpush1.msra.mxu0 0.0
    %119 = vmatprep.subr.mxu0 0.0
    %120 = vmatpush1.msra.mxu0 0.0
    %121 = vmatprep.subr.mxu0 0.0
    %122 = vmatpush1.msra.mxu0 0.0
    %123 = vmatprep.subr.mxu0 0.0
    %124 = vmatpush1.msra.mxu0 0.0
    %125 = vmatprep.subr.mxu0 0.0
    %126 = vmatpush1.msra.mxu0 0.0
    %127 = vmatprep.subr.mxu0 0.0
    %128 = vmatpush1.msra.mxu0 0.0
    %129 = vmatprep.subr.mxu0 0.0
    %130 = vmatpush1.msra.mxu0 0.0
    %131 = vmatprep.subr.mxu0 0.0
    %132 = vmatpush1.msra.mxu0 0.0
    %133 = vmatprep.subr.mxu0 0.0
    %134 = vmatpush1.msra.mxu0 0.0
    %135 = vmatprep.subr.mxu0 0.0
    %136 = vmatpush1.msra.mxu0 0.0
    %137 = vmatprep.subr.mxu0 0.0
    %138 = vmatpush1.msra.mxu0 0.0
    %139 = vmatprep.subr.mxu0 0.0
    %140 = vmatpush1.msra.mxu0 0.0
    %141 = vmatprep.subr.mxu0 0.0
    %142 = vmatpush1.msra.mxu0 0.0
    %143 = vmatprep.subr.mxu0 0.0
    %144 = vmatpush1.msra.mxu0 0.0
    %145 = vmatprep.subr.mxu0 0.0
    %v146 = vand.u32 %v113, 4294901760
    %147 = vmatpush1.msra.mxu0 %v146
    %148 = vmatprep.subr.mxu0 0.0
    %149 = vmatpush2.msra.mxu0 0.0
    %150 = vmatprep.subr.mxu0 0.0
    %151 = vmatpush2.msra.mxu0 0.0
    %152 = vmatprep.subr.mxu0 0.0
    %153 = vmatpush2.msra.mxu0 0.0
    %154 = vmatprep.subr.mxu0 0.0
    %155 = vmatpush2.msra.mxu0 0.0
    %156 = vmatprep.subr.mxu0 0.0
    %157 = vmatpush2.msra.mxu0 0.0
    %158 = vmatprep.subr.mxu0 0.0
    %159 = vmatpush2.msra.mxu0 0.0
    %160 = vmatprep.subr.mxu0 0.0
    %161 = vmatpush2.msra.mxu0 0.0
    %162 = vmatprep.subr.mxu0 0.0
    %163 = vmatpush2.msra.mxu0 0.0
    %164 = vmatprep.subr.mxu0 0.0
    %165 = vmatpush2.msra.mxu0 0.0
    %166 = vmatprep.subr.mxu0 0.0
    %167 = vmatpush2.msra.mxu0 0.0
    %168 = vmatprep.subr.mxu0 0.0
    %169 = vmatpush2.msra.mxu0 0.0
    %170 = vmatprep.subr.mxu0 0.0
    %171 = vmatpush2.msra.mxu0 0.0
    %172 = vmatprep.subr.mxu0 0.0
    %173 = vmatpush2.msra.mxu0 0.0
    %174 = vmatprep.subr.mxu0 0.0
    %175 = vmatpush2.msra.mxu0 0.0
    %176 = vmatprep.subr.mxu0 0.0
    %177 = vmatpush2.msra.mxu0 0.0
    %178 = vmatprep.subr.mxu0 0.0
    %179 = vmatpush2.msra.mxu0 0.0
    %180 = vmatprep.mubr.f32.mxu0 0.0
    %v181 = vand.u32 %v88, 4294901760
    %v182 = vsub.f32 %v88, %v181
    %v183 = vand.u32 %v182, 4294901760
    %v184 = vsub.f32 %v182, %v183
    %v185 = vand.u32 %v184, 4294901760
    %186 = vmatmul.mubr.f32.gmra.mxu0 %v185
    %v187 = vpop.f32.mrf.mxu0
    %v188 = vadd.f32 %v49, %v187
    %v189 = vpop.f32.mrf.mxu0
    %190 = vmatprep.mubr.f32.mxu0 0.0
    %v191 = vand.u32 %v91, 4294901760
    %v192 = vsub.f32 %v91, %v191
    %v193 = vand.u32 %v192, 4294901760
    %v194 = vsub.f32 %v192, %v193
    %v195 = vand.u32 %v194, 4294901760
    %196 = vmatmul.mubr.f32.gmra.mxu0 %v195
    %v197 = vpop.f32.mrf.mxu0
    %v198 = vadd.f32 %v54, %v197
    %v199 = vpop.f32.mrf.mxu0
    %200 = vmatprep.mubr.f32.mxu0 0.0
    %v201 = vand.u32 %v94, 4294901760
    %v202 = vsub.f32 %v94, %v201
    %v203 = vand.u32 %v202, 4294901760
    %v204 = vsub.f32 %v202, %v203
    %v205 = vand.u32 %v204, 4294901760
    %206 = vmatmul.mubr.f32.gmra.mxu0 %v205
    %v207 = vpop.f32.mrf.mxu0
    %v208 = vadd.f32 %v59, %v207
    %v209 = vpop.f32.mrf.mxu0
    %210 = vmatprep.mubr.f32.mxu0 0.0
    %v211 = vand.u32 %v97, 4294901760
    %v212 = vsub.f32 %v97, %v211
    %v213 = vand.u32 %v212, 4294901760
    %v214 = vsub.f32 %v212, %v213
    %v215 = vand.u32 %v214, 4294901760
    %216 = vmatmul.mubr.f32.gmra.mxu0 %v215
    %v217 = vpop.f32.mrf.mxu0
    %v218 = vadd.f32 %v64, %v217
    %v219 = vpop.f32.mrf.mxu0
    %220 = vmatprep.mubr.f32.mxu0 0.0
    %v221 = vand.u32 %v100, 4294901760
    %v222 = vsub.f32 %v100, %v221
    %v223 = vand.u32 %v222, 4294901760
    %v224 = vsub.f32 %v222, %v223
    %v225 = vand.u32 %v224, 4294901760
    %226 = vmatmul.mubr.f32.gmra.mxu0 %v225
    %v227 = vpop.f32.mrf.mxu0
    %v228 = vadd.f32 %v69, %v227
    %v229 = vpop.f32.mrf.mxu0
    %230 = vmatprep.mubr.f32.mxu0 0.0
    %v231 = vand.u32 %v103, 4294901760
    %v232 = vsub.f32 %v103, %v231
    %v233 = vand.u32 %v232, 4294901760
    %v234 = vsub.f32 %v232, %v233
    %v235 = vand.u32 %v234, 4294901760
    %236 = vmatmul.mubr.f32.gmra.mxu0 %v235
    %v237 = vpop.f32.mrf.mxu0
    %v238 = vadd.f32 %v74, %v237
    %v239 = vpop.f32.mrf.mxu0
    %240 = vmatprep.mubr.f32.mxu0 0.0
    %v241 = vand.u32 %v106, 4294901760
    %v242 = vsub.f32 %v106, %v241
    %v243 = vand.u32 %v242, 4294901760
    %v244 = vsub.f32 %v242, %v243
    %v245 = vand.u32 %v244, 4294901760
    %246 = vmatmul.mubr.f32.gmra.mxu0 %v245
    %v247 = vpop.f32.mrf.mxu0
    %v248 = vadd.f32 %v79, %v247
    %v249 = vpop.f32.mrf.mxu0
    %250 = vmatprep.mubr.f32.mxu0 0.0
    %v251 = vand.u32 %v109, 4294901760
    %v252 = vsub.f32 %v109, %v251
    %v253 = vand.u32 %v252, 4294901760
    %v254 = vsub.f32 %v252, %v253
    %v255 = vand.u32 %v254, 4294901760
    %256 = vmatmul.mubr.f32.gmra.mxu0 %v255
    %v257 = vpop.f32.mrf.mxu0
    %v258 = vadd.f32 %v84, %v257
    %v259 = vpop.f32.mrf.mxu0
    %260 = vdwg.mxu0
    %261 = vmatprep.subr.mxu0 0.0
    %262 = vmatpush1.msra.mxu0 0.0
    %263 = vmatprep.subr.mxu0 0.0
    %264 = vmatpush1.msra.mxu0 0.0
    %265 = vmatprep.subr.mxu0 0.0
    %266 = vmatpush1.msra.mxu0 0.0
    %267 = vmatprep.subr.mxu0 0.0
    %268 = vmatpush1.msra.mxu0 0.0
    %269 = vmatprep.subr.mxu0 0.0
    %270 = vmatpush1.msra.mxu0 0.0
    %271 = vmatprep.subr.mxu0 0.0
    %272 = vmatpush1.msra.mxu0 0.0
    %273 = vmatprep.subr.mxu0 0.0
    %274 = vmatpush1.msra.mxu0 0.0
    %275 = vmatprep.subr.mxu0 0.0
    %276 = vmatpush1.msra.mxu0 0.0
    %277 = vmatprep.subr.mxu0 0.0
    %278 = vmatpush1.msra.mxu0 0.0
    %279 = vmatprep.subr.mxu0 0.0
    %280 = vmatpush1.msra.mxu0 0.0
    %281 = vmatprep.subr.mxu0 0.0
    %282 = vmatpush1.msra.mxu0 0.0
    %283 = vmatprep.subr.mxu0 0.0
    %284 = vmatpush1.msra.mxu0 0.0
    %285 = vmatprep.subr.mxu0 0.0
    %286 = vmatpush1.msra.mxu0 0.0
    %287 = vmatprep.subr.mxu0 0.0
    %288 = vmatpush1.msra.mxu0 0.0
    %289 = vmatprep.subr.mxu0 0.0
    %290 = vmatpush1.msra.mxu0 0.0
    %291 = vmatprep.subr.mxu0 0.0
    %v292 = vand.u32 %v113, 4294901760
    %v293 = vsub.f32 %v113, %v292
    %v294 = vand.u32 %v293, 4294901760
    %v295 = vsub.f32 %v293, %v294
    %v296 = vand.u32 %v295, 4294901760
    %297 = vmatpush1.msra.mxu0 %v296
    %298 = vmatprep.subr.mxu0 0.0
    %299 = vmatpush2.msra.mxu0 0.0
    %300 = vmatprep.subr.mxu0 0.0
    %301 = vmatpush2.msra.mxu0 0.0
    %302 = vmatprep.subr.mxu0 0.0
    %303 = vmatpush2.msra.mxu0 0.0
    %304 = vmatprep.subr.mxu0 0.0
    %305 = vmatpush2.msra.mxu0 0.0
    %306 = vmatprep.subr.mxu0 0.0
    %307 = vmatpush2.msra.mxu0 0.0
    %308 = vmatprep.subr.mxu0 0.0
    %309 = vmatpush2.msra.mxu0 0.0
    %310 = vmatprep.subr.mxu0 0.0
    %311 = vmatpush2.msra.mxu0 0.0
    %312 = vmatprep.subr.mxu0 0.0
    %313 = vmatpush2.msra.mxu0 0.0
    %314 = vmatprep.subr.mxu0 0.0
    %315 = vmatpush2.msra.mxu0 0.0
    %316 = vmatprep.subr.mxu0 0.0
    %317 = vmatpush2.msra.mxu0 0.0
    %318 = vmatprep.subr.mxu0 0.0
    %319 = vmatpush2.msra.mxu0 0.0
    %320 = vmatprep.subr.mxu0 0.0
    %321 = vmatpush2.msra.mxu0 0.0
    %322 = vmatprep.subr.mxu0 0.0
    %323 = vmatpush2.msra.mxu0 0.0
    %324 = vmatprep.subr.mxu0 0.0
    %325 = vmatpush2.msra.mxu0 0.0
    %326 = vmatprep.subr.mxu0 0.0
    %327 = vmatpush2.msra.mxu0 0.0
    %328 = vmatprep.subr.mxu0 0.0
    %329 = vmatpush2.msra.mxu0 0.0
    %330 = vmatprep.mubr.f32.mxu0 0.0
    %v331 = vand.u32 %v88, 4294901760
    %332 = vmatmul.mubr.f32.gmra.mxu0 %v331
    %v333 = vpop.f32.mrf.mxu0
    %v334 = vadd.f32 %v188, %v333
    %v335 = vpop.f32.mrf.mxu0
    %336 = vmatprep.mubr.f32.mxu0 0.0
    %v337 = vand.u32 %v91, 4294901760
    %338 = vmatmul.mubr.f32.gmra.mxu0 %v337
    %v339 = vpop.f32.mrf.mxu0
    %v340 = vadd.f32 %v198, %v339
    %v341 = vpop.f32.mrf.mxu0
    %342 = vmatprep.mubr.f32.mxu0 0.0
    %v343 = vand.u32 %v94, 4294901760
    %344 = vmatmul.mubr.f32.gmra.mxu0 %v343
    %v345 = vpop.f32.mrf.mxu0
    %v346 = vadd.f32 %v208, %v345
    %v347 = vpop.f32.mrf.mxu0
    %348 = vmatprep.mubr.f32.mxu0 0.0
    %v349 = vand.u32 %v97, 4294901760
    %350 = vmatmul.mubr.f32.gmra.mxu0 %v349
    %v351 = vpop.f32.mrf.mxu0
    %v352 = vadd.f32 %v218, %v351
    %v353 = vpop.f32.mrf.mxu0
    %354 = vmatprep.mubr.f32.mxu0 0.0
    %v355 = vand.u32 %v100, 4294901760
    %356 = vmatmul.mubr.f32.gmra.mxu0 %v355
    %v357 = vpop.f32.mrf.mxu0
    %v358 = vadd.f32 %v228, %v357
    %v359 = vpop.f32.mrf.mxu0
    %360 = vmatprep.mubr.f32.mxu0 0.0
    %v361 = vand.u32 %v103, 4294901760
    %362 = vmatmul.mubr.f32.gmra.mxu0 %v361
    %v363 = vpop.f32.mrf.mxu0
    %v364 = vadd.f32 %v238, %v363
    %v365 = vpop.f32.mrf.mxu0
    %366 = vmatprep.mubr.f32.mxu0 0.0
    %v367 = vand.u32 %v106, 4294901760
    %368 = vmatmul.mubr.f32.gmra.mxu0 %v367
    %v369 = vpop.f32.mrf.mxu0
    %v370 = vadd.f32 %v248, %v369
    %v371 = vpop.f32.mrf.mxu0
    %372 = vmatprep.mubr.f32.mxu0 0.0
    %v373 = vand.u32 %v109, 4294901760
    %374 = vmatmul.mubr.f32.gmra.mxu0 %v373
    %v375 = vpop.f32.mrf.mxu0
    %v376 = vadd.f32 %v258, %v375
    %v377 = vpop.f32.mrf.mxu0
    %378 = vdwg.mxu0
    %379 = vmatprep.subr.mxu0 0.0
    %380 = vmatpush1.msra.mxu0 0.0
    %381 = vmatprep.subr.mxu0 0.0
    %382 = vmatpush1.msra.mxu0 0.0
    %383 = vmatprep.subr.mxu0 0.0
    %384 = vmatpush1.msra.mxu0 0.0
    %385 = vmatprep.subr.mxu0 0.0
    %386 = vmatpush1.msra.mxu0 0.0
    %387 = vmatprep.subr.mxu0 0.0
    %388 = vmatpush1.msra.mxu0 0.0
    %389 = vmatprep.subr.mxu0 0.0
    %390 = vmatpush1.msra.mxu0 0.0
    %391 = vmatprep.subr.mxu0 0.0
    %392 = vmatpush1.msra.mxu0 0.0
    %393 = vmatprep.subr.mxu0 0.0
    %394 = vmatpush1.msra.mxu0 0.0
    %395 = vmatprep.subr.mxu0 0.0
    %396 = vmatpush1.msra.mxu0 0.0
    %397 = vmatprep.subr.mxu0 0.0
    %398 = vmatpush1.msra.mxu0 0.0
    %399 = vmatprep.subr.mxu0 0.0
    %400 = vmatpush1.msra.mxu0 0.0
    %401 = vmatprep.subr.mxu0 0.0
    %402 = vmatpush1.msra.mxu0 0.0
    %403 = vmatprep.subr.mxu0 0.0
    %404 = vmatpush1.msra.mxu0 0.0
    %405 = vmatprep.subr.mxu0 0.0
    %406 = vmatpush1.msra.mxu0 0.0
    %407 = vmatprep.subr.mxu0 0.0
    %408 = vmatpush1.msra.mxu0 0.0
    %409 = vmatprep.subr.mxu0 0.0
    %v410 = vand.u32 %v113, 4294901760
    %v411 = vsub.f32 %v113, %v410
    %412 = vmatpush1.msra.mxu0 %v411
    %413 = vmatprep.subr.mxu0 0.0
    %414 = vmatpush2.msra.mxu0 0.0
    %415 = vmatprep.subr.mxu0 0.0
    %416 = vmatpush2.msra.mxu0 0.0
    %417 = vmatprep.subr.mxu0 0.0
    %418 = vmatpush2.msra.mxu0 0.0
    %419 = vmatprep.subr.mxu0 0.0
    %420 = vmatpush2.msra.mxu0 0.0
    %421 = vmatprep.subr.mxu0 0.0
    %422 = vmatpush2.msra.mxu0 0.0
    %423 = vmatprep.subr.mxu0 0.0
    %424 = vmatpush2.msra.mxu0 0.0
    %425 = vmatprep.subr.mxu0 0.0
    %426 = vmatpush2.msra.mxu0 0.0
    %427 = vmatprep.subr.mxu0 0.0
    %428 = vmatpush2.msra.mxu0 0.0
    %429 = vmatprep.subr.mxu0 0.0
    %430 = vmatpush2.msra.mxu0 0.0
    %431 = vmatprep.subr.mxu0 0.0
    %432 = vmatpush2.msra.mxu0 0.0
    %433 = vmatprep.subr.mxu0 0.0
    %434 = vmatpush2.msra.mxu0 0.0
    %435 = vmatprep.subr.mxu0 0.0
    %436 = vmatpush2.msra.mxu0 0.0
    %437 = vmatprep.subr.mxu0 0.0
    %438 = vmatpush2.msra.mxu0 0.0
    %439 = vmatprep.subr.mxu0 0.0
    %440 = vmatpush2.msra.mxu0 0.0
    %441 = vmatprep.subr.mxu0 0.0
    %442 = vmatpush2.msra.mxu0 0.0
    %443 = vmatprep.subr.mxu0 0.0
    %444 = vmatpush2.msra.mxu0 0.0
    %445 = vmatprep.mubr.f32.mxu0 0.0
    %v446 = vand.u32 %v88, 4294901760
    %v447 = vsub.f32 %v88, %v446
    %448 = vmatmul.mubr.f32.gmra.mxu0 %v447
    %v449 = vpop.f32.mrf.mxu0
    %v450 = vadd.f32 %v334, %v449
    %v451 = vpop.f32.mrf.mxu0
    %452 = vmatprep.mubr.f32.mxu0 0.0
    %v453 = vand.u32 %v91, 4294901760
    %v454 = vsub.f32 %v91, %v453
    %455 = vmatmul.mubr.f32.gmra.mxu0 %v454
    %v456 = vpop.f32.mrf.mxu0
    %v457 = vadd.f32 %v340, %v456
    %v458 = vpop.f32.mrf.mxu0
    %459 = vmatprep.mubr.f32.mxu0 0.0
    %v460 = vand.u32 %v94, 4294901760
    %v461 = vsub.f32 %v94, %v460
    %462 = vmatmul.mubr.f32.gmra.mxu0 %v461
    %v463 = vpop.f32.mrf.mxu0
    %v464 = vadd.f32 %v346, %v463
    %v465 = vpop.f32.mrf.mxu0
    %466 = vmatprep.mubr.f32.mxu0 0.0
    %v467 = vand.u32 %v97, 4294901760
    %v468 = vsub.f32 %v97, %v467
    %469 = vmatmul.mubr.f32.gmra.mxu0 %v468
    %v470 = vpop.f32.mrf.mxu0
    %v471 = vadd.f32 %v352, %v470
    %v472 = vpop.f32.mrf.mxu0
    %473 = vmatprep.mubr.f32.mxu0 0.0
    %v474 = vand.u32 %v100, 4294901760
    %v475 = vsub.f32 %v100, %v474
    %476 = vmatmul.mubr.f32.gmra.mxu0 %v475
    %v477 = vpop.f32.mrf.mxu0
    %v478 = vadd.f32 %v358, %v477
    %v479 = vpop.f32.mrf.mxu0
    %480 = vmatprep.mubr.f32.mxu0 0.0
    %v481 = vand.u32 %v103, 4294901760
    %v482 = vsub.f32 %v103, %v481
    %483 = vmatmul.mubr.f32.gmra.mxu0 %v482
    %v484 = vpop.f32.mrf.mxu0
    %v485 = vadd.f32 %v364, %v484
    %v486 = vpop.f32.mrf.mxu0
    %487 = vmatprep.mubr.f32.mxu0 0.0
    %v488 = vand.u32 %v106, 4294901760
    %v489 = vsub.f32 %v106, %v488
    %490 = vmatmul.mubr.f32.gmra.mxu0 %v489
    %v491 = vpop.f32.mrf.mxu0
    %v492 = vadd.f32 %v370, %v491
    %v493 = vpop.f32.mrf.mxu0
    %494 = vmatprep.mubr.f32.mxu0 0.0
    %v495 = vand.u32 %v109, 4294901760
    %v496 = vsub.f32 %v109, %v495
    %497 = vmatmul.mubr.f32.gmra.mxu0 %v496
    %v498 = vpop.f32.mrf.mxu0
    %v499 = vadd.f32 %v376, %v498
    %v500 = vpop.f32.mrf.mxu0
    %501 = vdwg.mxu0
    %502 = vmatprep.subr.mxu0 0.0
    %503 = vmatpush1.msra.mxu0 0.0
    %504 = vmatprep.subr.mxu0 0.0
    %505 = vmatpush1.msra.mxu0 0.0
    %506 = vmatprep.subr.mxu0 0.0
    %507 = vmatpush1.msra.mxu0 0.0
    %508 = vmatprep.subr.mxu0 0.0
    %509 = vmatpush1.msra.mxu0 0.0
    %510 = vmatprep.subr.mxu0 0.0
    %511 = vmatpush1.msra.mxu0 0.0
    %512 = vmatprep.subr.mxu0 0.0
    %513 = vmatpush1.msra.mxu0 0.0
    %514 = vmatprep.subr.mxu0 0.0
    %515 = vmatpush1.msra.mxu0 0.0
    %516 = vmatprep.subr.mxu0 0.0
    %517 = vmatpush1.msra.mxu0 0.0
    %518 = vmatprep.subr.mxu0 0.0
    %519 = vmatpush1.msra.mxu0 0.0
    %520 = vmatprep.subr.mxu0 0.0
    %521 = vmatpush1.msra.mxu0 0.0
    %522 = vmatprep.subr.mxu0 0.0
    %523 = vmatpush1.msra.mxu0 0.0
    %524 = vmatprep.subr.mxu0 0.0
    %525 = vmatpush1.msra.mxu0 0.0
    %526 = vmatprep.subr.mxu0 0.0
    %527 = vmatpush1.msra.mxu0 0.0
    %528 = vmatprep.subr.mxu0 0.0
    %529 = vmatpush1.msra.mxu0 0.0
    %530 = vmatprep.subr.mxu0 0.0
    %531 = vmatpush1.msra.mxu0 0.0
    %532 = vmatprep.subr.mxu0 0.0
    %v533 = vand.u32 %v113, 4294901760
    %534 = vmatpush1.msra.mxu0 %v533
    %535 = vmatprep.subr.mxu0 0.0
    %536 = vmatpush2.msra.mxu0 0.0
    %537 = vmatprep.subr.mxu0 0.0
    %538 = vmatpush2.msra.mxu0 0.0
    %539 = vmatprep.subr.mxu0 0.0
    %540 = vmatpush2.msra.mxu0 0.0
    %541 = vmatprep.subr.mxu0 0.0
    %542 = vmatpush2.msra.mxu0 0.0
    %543 = vmatprep.subr.mxu0 0.0
    %544 = vmatpush2.msra.mxu0 0.0
    %545 = vmatprep.subr.mxu0 0.0
    %546 = vmatpush2.msra.mxu0 0.0
    %547 = vmatprep.subr.mxu0 0.0
    %548 = vmatpush2.msra.mxu0 0.0
    %549 = vmatprep.subr.mxu0 0.0
    %550 = vmatpush2.msra.mxu0 0.0
    %551 = vmatprep.subr.mxu0 0.0
    %552 = vmatpush2.msra.mxu0 0.0
    %553 = vmatprep.subr.mxu0 0.0
    %554 = vmatpush2.msra.mxu0 0.0
    %555 = vmatprep.subr.mxu0 0.0
    %556 = vmatpush2.msra.mxu0 0.0
    %557 = vmatprep.subr.mxu0 0.0
    %558 = vmatpush2.msra.mxu0 0.0
    %559 = vmatprep.subr.mxu0 0.0
    %560 = vmatpush2.msra.mxu0 0.0
    %561 = vmatprep.subr.mxu0 0.0
    %562 = vmatpush2.msra.mxu0 0.0
    %563 = vmatprep.subr.mxu0 0.0
    %564 = vmatpush2.msra.mxu0 0.0
    %565 = vmatprep.subr.mxu0 0.0
    %566 = vmatpush2.msra.mxu0 0.0
    %567 = vmatprep.mubr.f32.mxu0 0.0
    %v568 = vand.u32 %v88, 4294901760
    %v569 = vsub.f32 %v88, %v568
    %v570 = vand.u32 %v569, 4294901760
    %571 = vmatmul.mubr.f32.gmra.mxu0 %v570
    %v572 = vpop.f32.mrf.mxu0
    %v573 = vadd.f32 %v450, %v572
    %v574 = vpop.f32.mrf.mxu0
    %575 = vmatprep.mubr.f32.mxu0 0.0
    %v576 = vand.u32 %v91, 4294901760
    %v577 = vsub.f32 %v91, %v576
    %v578 = vand.u32 %v577, 4294901760
    %579 = vmatmul.mubr.f32.gmra.mxu0 %v578
    %v580 = vpop.f32.mrf.mxu0
    %v581 = vadd.f32 %v457, %v580
    %v582 = vpop.f32.mrf.mxu0
    %583 = vmatprep.mubr.f32.mxu0 0.0
    %v584 = vand.u32 %v94, 4294901760
    %v585 = vsub.f32 %v94, %v584
    %v586 = vand.u32 %v585, 4294901760
    %587 = vmatmul.mubr.f32.gmra.mxu0 %v586
    %v588 = vpop.f32.mrf.mxu0
    %v589 = vadd.f32 %v464, %v588
    %v590 = vpop.f32.mrf.mxu0
    %591 = vmatprep.mubr.f32.mxu0 0.0
    %v592 = vand.u32 %v97, 4294901760
    %v593 = vsub.f32 %v97, %v592
    %v594 = vand.u32 %v593, 4294901760
    %595 = vmatmul.mubr.f32.gmra.mxu0 %v594
    %v596 = vpop.f32.mrf.mxu0
    %v597 = vadd.f32 %v471, %v596
    %v598 = vpop.f32.mrf.mxu0
    %599 = vmatprep.mubr.f32.mxu0 0.0
    %v600 = vand.u32 %v100, 4294901760
    %v601 = vsub.f32 %v100, %v600
    %v602 = vand.u32 %v601, 4294901760
    %603 = vmatmul.mubr.f32.gmra.mxu0 %v602
    %v604 = vpop.f32.mrf.mxu0
    %v605 = vadd.f32 %v478, %v604
    %v606 = vpop.f32.mrf.mxu0
    %607 = vmatprep.mubr.f32.mxu0 0.0
    %v608 = vand.u32 %v103, 4294901760
    %v609 = vsub.f32 %v103, %v608
    %v610 = vand.u32 %v609, 4294901760
    %611 = vmatmul.mubr.f32.gmra.mxu0 %v610
    %v612 = vpop.f32.mrf.mxu0
    %v613 = vadd.f32 %v485, %v612
    %v614 = vpop.f32.mrf.mxu0
    %615 = vmatprep.mubr.f32.mxu0 0.0
    %v616 = vand.u32 %v106, 4294901760
    %v617 = vsub.f32 %v106, %v616
    %v618 = vand.u32 %v617, 4294901760
    %619 = vmatmul.mubr.f32.gmra.mxu0 %v618
    %v620 = vpop.f32.mrf.mxu0
    %v621 = vadd.f32 %v492, %v620
    %v622 = vpop.f32.mrf.mxu0
    %623 = vmatprep.mubr.f32.mxu0 0.0
    %v624 = vand.u32 %v109, 4294901760
    %v625 = vsub.f32 %v109, %v624
    %v626 = vand.u32 %v625, 4294901760
    %627 = vmatmul.mubr.f32.gmra.mxu0 %v626
    %v628 = vpop.f32.mrf.mxu0
    %v629 = vadd.f32 %v499, %v628
    %v630 = vpop.f32.mrf.mxu0
    %631 = vdwg.mxu0
    %632 = vmatprep.subr.mxu0 0.0
    %633 = vmatpush1.msra.mxu0 0.0
    %634 = vmatprep.subr.mxu0 0.0
    %635 = vmatpush1.msra.mxu0 0.0
    %636 = vmatprep.subr.mxu0 0.0
    %637 = vmatpush1.msra.mxu0 0.0
    %638 = vmatprep.subr.mxu0 0.0
    %639 = vmatpush1.msra.mxu0 0.0
    %640 = vmatprep.subr.mxu0 0.0
    %641 = vmatpush1.msra.mxu0 0.0
    %642 = vmatprep.subr.mxu0 0.0
    %643 = vmatpush1.msra.mxu0 0.0
    %644 = vmatprep.subr.mxu0 0.0
    %645 = vmatpush1.msra.mxu0 0.0
    %646 = vmatprep.subr.mxu0 0.0
    %647 = vmatpush1.msra.mxu0 0.0
    %648 = vmatprep.subr.mxu0 0.0
    %649 = vmatpush1.msra.mxu0 0.0
    %650 = vmatprep.subr.mxu0 0.0
    %651 = vmatpush1.msra.mxu0 0.0
    %652 = vmatprep.subr.mxu0 0.0
    %653 = vmatpush1.msra.mxu0 0.0
    %654 = vmatprep.subr.mxu0 0.0
    %655 = vmatpush1.msra.mxu0 0.0
    %656 = vmatprep.subr.mxu0 0.0
    %657 = vmatpush1.msra.mxu0 0.0
    %658 = vmatprep.subr.mxu0 0.0
    %659 = vmatpush1.msra.mxu0 0.0
    %660 = vmatprep.subr.mxu0 0.0
    %661 = vmatpush1.msra.mxu0 0.0
    %662 = vmatprep.subr.mxu0 0.0
    %v663 = vand.u32 %v113, 4294901760
    %v664 = vsub.f32 %v113, %v663
    %v665 = vand.u32 %v664, 4294901760
    %666 = vmatpush1.msra.mxu0 %v665
    %667 = vmatprep.subr.mxu0 0.0
    %668 = vmatpush2.msra.mxu0 0.0
    %669 = vmatprep.subr.mxu0 0.0
    %670 = vmatpush2.msra.mxu0 0.0
    %671 = vmatprep.subr.mxu0 0.0
    %672 = vmatpush2.msra.mxu0 0.0
    %673 = vmatprep.subr.mxu0 0.0
    %674 = vmatpush2.msra.mxu0 0.0
    %675 = vmatprep.subr.mxu0 0.0
    %676 = vmatpush2.msra.mxu0 0.0
    %677 = vmatprep.subr.mxu0 0.0
    %678 = vmatpush2.msra.mxu0 0.0
    %679 = vmatprep.subr.mxu0 0.0
    %680 = vmatpush2.msra.mxu0 0.0
    %681 = vmatprep.subr.mxu0 0.0
    %682 = vmatpush2.msra.mxu0 0.0
    %683 = vmatprep.subr.mxu0 0.0
    %684 = vmatpush2.msra.mxu0 0.0
    %685 = vmatprep.subr.mxu0 0.0
    %686 = vmatpush2.msra.mxu0 0.0
    %687 = vmatprep.subr.mxu0 0.0
    %688 = vmatpush2.msra.mxu0 0.0
    %689 = vmatprep.subr.mxu0 0.0
    %690 = vmatpush2.msra.mxu0 0.0
    %691 = vmatprep.subr.mxu0 0.0
    %692 = vmatpush2.msra.mxu0 0.0
    %693 = vmatprep.subr.mxu0 0.0
    %694 = vmatpush2.msra.mxu0 0.0
    %695 = vmatprep.subr.mxu0 0.0
    %696 = vmatpush2.msra.mxu0 0.0
    %697 = vmatprep.subr.mxu0 0.0
    %698 = vmatpush2.msra.mxu0 0.0
    %699 = vmatprep.mubr.f32.mxu0 0.0
    %v700 = vand.u32 %v88, 4294901760
    %701 = vmatmul.mubr.f32.gmra.mxu0 %v700
    %v702 = vpop.f32.mrf.mxu0
    %v703 = vadd.f32 %v573, %v702
    %v704 = vpop.f32.mrf.mxu0
    %705 = vmatprep.mubr.f32.mxu0 0.0
    %v706 = vand.u32 %v91, 4294901760
    %707 = vmatmul.mubr.f32.gmra.mxu0 %v706
    %v708 = vpop.f32.mrf.mxu0
    %v709 = vadd.f32 %v581, %v708
    %v710 = vpop.f32.mrf.mxu0
    %711 = vmatprep.mubr.f32.mxu0 0.0
    %v712 = vand.u32 %v94, 4294901760
    %713 = vmatmul.mubr.f32.gmra.mxu0 %v712
    %v714 = vpop.f32.mrf.mxu0
    %v715 = vadd.f32 %v589, %v714
    %v716 = vpop.f32.mrf.mxu0
    %717 = vmatprep.mubr.f32.mxu0 0.0
    %v718 = vand.u32 %v97, 4294901760
    %719 = vmatmul.mubr.f32.gmra.mxu0 %v718
    %v720 = vpop.f32.mrf.mxu0
    %v721 = vadd.f32 %v597, %v720
    %v722 = vpop.f32.mrf.mxu0
    %723 = vmatprep.mubr.f32.mxu0 0.0
    %v724 = vand.u32 %v100, 4294901760
    %725 = vmatmul.mubr.f32.gmra.mxu0 %v724
    %v726 = vpop.f32.mrf.mxu0
    %v727 = vadd.f32 %v605, %v726
    %v728 = vpop.f32.mrf.mxu0
    %729 = vmatprep.mubr.f32.mxu0 0.0
    %v730 = vand.u32 %v103, 4294901760
    %731 = vmatmul.mubr.f32.gmra.mxu0 %v730
    %v732 = vpop.f32.mrf.mxu0
    %v733 = vadd.f32 %v613, %v732
    %v734 = vpop.f32.mrf.mxu0
    %735 = vmatprep.mubr.f32.mxu0 0.0
    %v736 = vand.u32 %v106, 4294901760
    %737 = vmatmul.mubr.f32.gmra.mxu0 %v736
    %v738 = vpop.f32.mrf.mxu0
    %v739 = vadd.f32 %v621, %v738
    %v740 = vpop.f32.mrf.mxu0
    %741 = vmatprep.mubr.f32.mxu0 0.0
    %v742 = vand.u32 %v109, 4294901760
    %743 = vmatmul.mubr.f32.gmra.mxu0 %v742
    %v744 = vpop.f32.mrf.mxu0
    %v745 = vadd.f32 %v629, %v744
    %v746 = vpop.f32.mrf.mxu0
    %747 = vdwg.mxu0
    %748 = vmatprep.subr.mxu0 0.0
    %749 = vmatpush1.msra.mxu0 0.0
    %750 = vmatprep.subr.mxu0 0.0
    %751 = vmatpush1.msra.mxu0 0.0
    %752 = vmatprep.subr.mxu0 0.0
    %753 = vmatpush1.msra.mxu0 0.0
    %754 = vmatprep.subr.mxu0 0.0
    %755 = vmatpush1.msra.mxu0 0.0
    %756 = vmatprep.subr.mxu0 0.0
    %757 = vmatpush1.msra.mxu0 0.0
    %758 = vmatprep.subr.mxu0 0.0
    %759 = vmatpush1.msra.mxu0 0.0
    %760 = vmatprep.subr.mxu0 0.0
    %761 = vmatpush1.msra.mxu0 0.0
    %762 = vmatprep.subr.mxu0 0.0
    %763 = vmatpush1.msra.mxu0 0.0
    %764 = vmatprep.subr.mxu0 0.0
    %765 = vmatpush1.msra.mxu0 0.0
    %766 = vmatprep.subr.mxu0 0.0
    %767 = vmatpush1.msra.mxu0 0.0
    %768 = vmatprep.subr.mxu0 0.0
    %769 = vmatpush1.msra.mxu0 0.0
    %770 = vmatprep.subr.mxu0 0.0
    %771 = vmatpush1.msra.mxu0 0.0
    %772 = vmatprep.subr.mxu0 0.0
    %773 = vmatpush1.msra.mxu0 0.0
    %774 = vmatprep.subr.mxu0 0.0
    %775 = vmatpush1.msra.mxu0 0.0
    %776 = vmatprep.subr.mxu0 0.0
    %777 = vmatpush1.msra.mxu0 0.0
    %778 = vmatprep.subr.mxu0 0.0
    %v779 = vand.u32 %v113, 4294901760
    %780 = vmatpush1.msra.mxu0 %v779
    %781 = vmatprep.subr.mxu0 0.0
    %782 = vmatpush2.msra.mxu0 0.0
    %783 = vmatprep.subr.mxu0 0.0
    %784 = vmatpush2.msra.mxu0 0.0
    %785 = vmatprep.subr.mxu0 0.0
    %786 = vmatpush2.msra.mxu0 0.0
    %787 = vmatprep.subr.mxu0 0.0
    %788 = vmatpush2.msra.mxu0 0.0
    %789 = vmatprep.subr.mxu0 0.0
    %790 = vmatpush2.msra.mxu0 0.0
    %791 = vmatprep.subr.mxu0 0.0
    %792 = vmatpush2.msra.mxu0 0.0
    %793 = vmatprep.subr.mxu0 0.0
    %794 = vmatpush2.msra.mxu0 0.0
    %795 = vmatprep.subr.mxu0 0.0
    %796 = vmatpush2.msra.mxu0 0.0
    %797 = vmatprep.subr.mxu0 0.0
    %798 = vmatpush2.msra.mxu0 0.0
    %799 = vmatprep.subr.mxu0 0.0
    %800 = vmatpush2.msra.mxu0 0.0
    %801 = vmatprep.subr.mxu0 0.0
    %802 = vmatpush2.msra.mxu0 0.0
    %803 = vmatprep.subr.mxu0 0.0
    %804 = vmatpush2.msra.mxu0 0.0
    %805 = vmatprep.subr.mxu0 0.0
    %806 = vmatpush2.msra.mxu0 0.0
    %807 = vmatprep.subr.mxu0 0.0
    %808 = vmatpush2.msra.mxu0 0.0
    %809 = vmatprep.subr.mxu0 0.0
    %810 = vmatpush2.msra.mxu0 0.0
    %811 = vmatprep.subr.mxu0 0.0
    %812 = vmatpush2.msra.mxu0 0.0
    %813 = vmatprep.mubr.f32.mxu0 0.0
    %v814 = vand.u32 %v88, 4294901760
    %815 = vmatmul.mubr.f32.gmra.mxu0 %v814
    %v816 = vpop.f32.mrf.mxu0
    %v817 = vadd.f32 %v703, %v816
    %v818 = vpop.f32.mrf.mxu0
    %819 = vmatprep.mubr.f32.mxu0 0.0
    %v820 = vand.u32 %v91, 4294901760
    %821 = vmatmul.mubr.f32.gmra.mxu0 %v820
    %v822 = vpop.f32.mrf.mxu0
    %v823 = vadd.f32 %v709, %v822
    %v824 = vpop.f32.mrf.mxu0
    %825 = vmatprep.mubr.f32.mxu0 0.0
    %v826 = vand.u32 %v94, 4294901760
    %827 = vmatmul.mubr.f32.gmra.mxu0 %v826
    %v828 = vpop.f32.mrf.mxu0
    %v829 = vadd.f32 %v715, %v828
    %v830 = vpop.f32.mrf.mxu0
    %831 = vmatprep.mubr.f32.mxu0 0.0
    %v832 = vand.u32 %v97, 4294901760
    %833 = vmatmul.mubr.f32.gmra.mxu0 %v832
    %v834 = vpop.f32.mrf.mxu0
    %v835 = vadd.f32 %v721, %v834
    %v836 = vpop.f32.mrf.mxu0
    %837 = vmatprep.mubr.f32.mxu0 0.0
    %v838 = vand.u32 %v100, 4294901760
    %839 = vmatmul.mubr.f32.gmra.mxu0 %v838
    %v840 = vpop.f32.mrf.mxu0
    %v841 = vadd.f32 %v727, %v840
    %v842 = vpop.f32.mrf.mxu0
    %843 = vmatprep.mubr.f32.mxu0 0.0
    %v844 = vand.u32 %v103, 4294901760
    %845 = vmatmul.mubr.f32.gmra.mxu0 %v844
    %v846 = vpop.f32.mrf.mxu0
    %v847 = vadd.f32 %v733, %v846
    %v848 = vpop.f32.mrf.mxu0
    %849 = vmatprep.mubr.f32.mxu0 0.0
    %v850 = vand.u32 %v106, 4294901760
    %851 = vmatmul.mubr.f32.gmra.mxu0 %v850
    %v852 = vpop.f32.mrf.mxu0
    %v853 = vadd.f32 %v739, %v852
    %v854 = vpop.f32.mrf.mxu0
    %855 = vmatprep.mubr.f32.mxu0 0.0
    %v856 = vand.u32 %v109, 4294901760
    %857 = vmatmul.mubr.f32.gmra.mxu0 %v856
    %v858 = vpop.f32.mrf.mxu0
    %v859 = vadd.f32 %v745, %v858
    %v860 = vpop.f32.mrf.mxu0
    %861 = vdwg.mxu0
    %v862 = vmax.f32 %v817, 0.0
    %v863 = vmax.f32 %v823, 0.0
    %v864 = vmax.f32 %v829, 0.0
    %v865 = vmax.f32 %v835, 0.0
    %v866 = vmax.f32 %v841, 0.0
    %v867 = vmax.f32 %v847, 0.0
    %v868 = vmax.f32 %v853, 0.0
    %v869 = vmax.f32 %v859, 0.0
    %v870 = vand.u32 2147483647, %v817
    %v871 = vand.u32 2147483647, %v823
    %v872 = vand.u32 2147483647, %v829
    %v873 = vand.u32 2147483647, %v835
    %v874 = vand.u32 2147483647, %v841
    %v875 = vand.u32 2147483647, %v847
    %v876 = vand.u32 2147483647, %v853
    %v877 = vand.u32 2147483647, %v859
    %v878 = vsub.f32 0.0, %v870
    %v879 = vsub.f32 0.0, %v871
    %v880 = vsub.f32 0.0, %v872
    %v881 = vsub.f32 0.0, %v873
    %v882 = vsub.f32 0.0, %v874
    %v883 = vsub.f32 0.0, %v875
    %v884 = vsub.f32 0.0, %v876
    %v885 = vsub.f32 0.0, %v877
    %v886 = vmul.f32 %v878, 1.442695
    %v887 = vpow.pop %v886
    %v888 = vmul.f32 %v879, 1.442695
    %v889 = vpow.pop %v888
    %v890 = vmul.f32 %v880, 1.442695
    %v891 = vpow.pop %v890
    %v892 = vmul.f32 %v881, 1.442695
    %v893 = vpow.pop %v892
    %v894 = vmul.f32 %v882, 1.442695
    %v895 = vpow.pop %v894
    %v896 = vmul.f32 %v883, 1.442695
    %v897 = vpow.pop %v896
    %v898 = vmul.f32 %v884, 1.442695
    %v899 = vpow.pop %v898
    %v900 = vmul.f32 %v885, 1.442695
    %v901 = vpow.pop %v900
    %v902 = vadd.f32 %v887, 1.0
    %v903 = vlog2.pop %v902
    %v904 = vmul.f32 %v903, 0.6931472
    %v905 = vmul.f32 -0.5, %v887
    %v906 = vadd.f32 %v905, 1.0
    %v907 = vmul.f32 %v906, %v887
    %v908 = vand.u32 2147483647, %v887
    %vm909 = vcmp.lt.f32.partialorder %v908, 0.0004427343
    %v910 = vsel %vm909, %v907, %v904
    %v911 = vadd.f32 %v889, 1.0
    %v912 = vlog2.pop %v911
    %v913 = vmul.f32 %v912, 0.6931472
    %v914 = vmul.f32 -0.5, %v889
    %v915 = vadd.f32 %v914, 1.0
    %v916 = vmul.f32 %v915, %v889
    %v917 = vand.u32 2147483647, %v889
    %vm918 = vcmp.lt.f32.partialorder %v917, 0.0004427343
    %v919 = vsel %vm918, %v916, %v913
    %v920 = vadd.f32 %v891, 1.0
    %v921 = vlog2.pop %v920
    %v922 = vmul.f32 %v921, 0.6931472
    %v923 = vmul.f32 -0.5, %v891
    %v924 = vadd.f32 %v923, 1.0
    %v925 = vmul.f32 %v924, %v891
    %v926 = vand.u32 2147483647, %v891
    %vm927 = vcmp.lt.f32.partialorder %v926, 0.0004427343
    %v928 = vsel %vm927, %v925, %v922
    %v929 = vadd.f32 %v893, 1.0
    %v930 = vlog2.pop %v929
    %v931 = vmul.f32 %v930, 0.6931472
    %v932 = vmul.f32 -0.5, %v893
    %v933 = vadd.f32 %v932, 1.0
    %v934 = vmul.f32 %v933, %v893
    %v935 = vand.u32 2147483647, %v893
    %vm936 = vcmp.lt.f32.partialorder %v935, 0.0004427343
    %v937 = vsel %vm936, %v934, %v931
    %v938 = vadd.f32 %v895, 1.0
    %v939 = vlog2.pop %v938
    %v940 = vmul.f32 %v939, 0.6931472
    %v941 = vmul.f32 -0.5, %v895
    %v942 = vadd.f32 %v941, 1.0
    %v943 = vmul.f32 %v942, %v895
    %v944 = vand.u32 2147483647, %v895
    %vm945 = vcmp.lt.f32.partialorder %v944, 0.0004427343
    %v946 = vsel %vm945, %v943, %v940
    %v947 = vadd.f32 %v897, 1.0
    %v948 = vlog2.pop %v947
    %v949 = vmul.f32 %v948, 0.6931472
    %v950 = vmul.f32 -0.5, %v897
    %v951 = vadd.f32 %v950, 1.0
    %v952 = vmul.f32 %v951, %v897
    %v953 = vand.u32 2147483647, %v897
    %vm954 = vcmp.lt.f32.partialorder %v953, 0.0004427343
    %v955 = vsel %vm954, %v952, %v949
    %v956 = vadd.f32 %v899, 1.0
    %v957 = vlog2.pop %v956
    %v958 = vmul.f32 %v957, 0.6931472
    %v959 = vmul.f32 -0.5, %v899
    %v960 = vadd.f32 %v959, 1.0
    %v961 = vmul.f32 %v960, %v899
    %v962 = vand.u32 2147483647, %v899
    %vm963 = vcmp.lt.f32.partialorder %v962, 0.0004427343
    %v964 = vsel %vm963, %v961, %v958
    %v965 = vadd.f32 %v901, 1.0
    %v966 = vlog2.pop %v965
    %v967 = vmul.f32 %v966, 0.6931472
    %v968 = vmul.f32 -0.5, %v901
    %v969 = vadd.f32 %v968, 1.0
    %v970 = vmul.f32 %v969, %v901
    %v971 = vand.u32 2147483647, %v901
    %vm972 = vcmp.lt.f32.partialorder %v971, 0.0004427343
    %v973 = vsel %vm972, %v970, %v967
    %v974 = vadd.f32 %v862, %v910
    %v975 = vadd.f32 %v863, %v919
    %v976 = vadd.f32 %v864, %v928
    %v977 = vadd.f32 %v865, %v937
    %v978 = vadd.f32 %v866, %v946
    %v979 = vadd.f32 %v867, %v955
    %v980 = vadd.f32 %v868, %v964
    %v981 = vadd.f32 %v869, %v973
    %v982 = vld [vmem:[%s3] sm:$0xff]
    %v983 = vld [vmem:[%s3 + $0x8] sm:$0xff]
    %v984 = vld [vmem:[%s3 + $0x10] sm:$0xff]
    %v985 = vld [vmem:[%s3 + $0x18] sm:$0xff]
    %v986 = vld [vmem:[%s3 + $0x20] sm:$0xff]
    %v987 = vld [vmem:[%s3 + $0x28] sm:$0xff]
    %v988 = vld [vmem:[%s3 + $0x30] sm:$0xff]
    %v989 = vld [vmem:[%s3 + $0x38] sm:$0xff]
    %v990 = vld [vmem:[%s4] sm:$0xff]
    %v991 = vld [vmem:[%s4 + $0x8] sm:$0xff]
    %v992 = vld [vmem:[%s4 + $0x10] sm:$0xff]
    %v993 = vld [vmem:[%s4 + $0x18] sm:$0xff]
    %v994 = vld [vmem:[%s4 + $0x20] sm:$0xff]
    %v995 = vld [vmem:[%s4 + $0x28] sm:$0xff]
    %v996 = vld [vmem:[%s4 + $0x30] sm:$0xff]
    %v997 = vld [vmem:[%s4 + $0x38] sm:$0xff]
    %999 = vset.pattern.permute.xlu0 0
    %1000 = vperm.xlu0 %999, %v990
    %v1001 = vpop.permute.xlu0 %1000
    %1004 = vset.pattern.permute.xlu0 0
    %1005 = vperm.xlu0 %1004, %v991
    %v1006 = vpop.permute.xlu0 %1005
    %1009 = vset.pattern.permute.xlu0 0
    %1010 = vperm.xlu0 %1009, %v992
    %v1011 = vpop.permute.xlu0 %1010
    %1014 = vset.pattern.permute.xlu0 0
    %1015 = vperm.xlu0 %1014, %v993
    %v1016 = vpop.permute.xlu0 %1015
    %1019 = vset.pattern.permute.xlu0 0
    %1020 = vperm.xlu0 %1019, %v994
    %v1021 = vpop.permute.xlu0 %1020
    %1024 = vset.pattern.permute.xlu0 0
    %1025 = vperm.xlu0 %1024, %v995
    %v1026 = vpop.permute.xlu0 %1025
    %1029 = vset.pattern.permute.xlu0 0
    %1030 = vperm.xlu0 %1029, %v996
    %v1031 = vpop.permute.xlu0 %1030
    %1034 = vset.pattern.permute.xlu0 0
    %1035 = vperm.xlu0 %1034, %v997
    %v1036 = vpop.permute.xlu0 %1035
    %vm1038 = vcmask 523264
    %v1040 = vsel %vm1038, %v982, 0
    %v1043 = vsel %vm1038, %v983, 0
    %v1046 = vsel %vm1038, %v984, 0
    %v1049 = vsel %vm1038, %v985, 0
    %v1052 = vsel %vm1038, %v986, 0
    %v1055 = vsel %vm1038, %v987, 0
    %v1058 = vsel %vm1038, %v988, 0
    %v1061 = vsel %vm1038, %v989, 0
    %1063 = vmatprep.subr.mxu0 0.0
    %1064 = vmatpush1.msra.mxu0 0.0
    %1065 = vmatprep.subr.mxu0 0.0
    %1066 = vmatpush1.msra.mxu0 0.0
    %1067 = vmatprep.subr.mxu0 0.0
    %1068 = vmatpush1.msra.mxu0 0.0
    %1069 = vmatprep.subr.mxu0 0.0
    %1070 = vmatpush1.msra.mxu0 0.0
    %1071 = vmatprep.subr.mxu0 0.0
    %1072 = vmatpush1.msra.mxu0 0.0
    %1073 = vmatprep.subr.mxu0 0.0
    %1074 = vmatpush1.msra.mxu0 0.0
    %1075 = vmatprep.subr.mxu0 0.0
    %1076 = vmatpush1.msra.mxu0 0.0
    %1077 = vmatprep.subr.mxu0 0.0
    %1078 = vmatpush1.msra.mxu0 0.0
    %1079 = vmatprep.subr.mxu0 0.0
    %v1080 = vand.u32 %v981, 4294901760
    %1081 = vmatpush1.msra.mxu0 %v1080
    %1082 = vmatprep.subr.mxu0 0.0
    %v1083 = vand.u32 %v980, 4294901760
    %1084 = vmatpush1.msra.mxu0 %v1083
    %1085 = vmatprep.subr.mxu0 0.0
    %v1086 = vand.u32 %v979, 4294901760
    %1087 = vmatpush1.msra.mxu0 %v1086
    %1088 = vmatprep.subr.mxu0 0.0
    %v1089 = vand.u32 %v978, 4294901760
    %1090 = vmatpush1.msra.mxu0 %v1089
    %1091 = vmatprep.subr.mxu0 0.0
    %v1092 = vand.u32 %v977, 4294901760
    %1093 = vmatpush1.msra.mxu0 %v1092
    %1094 = vmatprep.subr.mxu0 0.0
    %v1095 = vand.u32 %v976, 4294901760
    %1096 = vmatpush1.msra.mxu0 %v1095
    %1097 = vmatprep.subr.mxu0 0.0
    %v1098 = vand.u32 %v975, 4294901760
    %1099 = vmatpush1.msra.mxu0 %v1098
    %1100 = vmatprep.subr.mxu0 0.0
    %v1101 = vand.u32 %v974, 4294901760
    %1102 = vmatpush1.msra.mxu0 %v1101
    %1103 = vmatprep.subr.mxu0 0.0
    %1104 = vmatpush2.msra.mxu0 0.0
    %1105 = vmatprep.subr.mxu0 0.0
    %1106 = vmatpush2.msra.mxu0 0.0
    %1107 = vmatprep.subr.mxu0 0.0
    %1108 = vmatpush2.msra.mxu0 0.0
    %1109 = vmatprep.subr.mxu0 0.0
    %1110 = vmatpush2.msra.mxu0 0.0
    %1111 = vmatprep.subr.mxu0 0.0
    %1112 = vmatpush2.msra.mxu0 0.0
    %1113 = vmatprep.subr.mxu0 0.0
    %1114 = vmatpush2.msra.mxu0 0.0
    %1115 = vmatprep.subr.mxu0 0.0
    %1116 = vmatpush2.msra.mxu0 0.0
    %1117 = vmatprep.subr.mxu0 0.0
    %1118 = vmatpush2.msra.mxu0 0.0
    %1119 = vmatprep.subr.mxu0 0.0
    %1120 = vmatpush2.msra.mxu0 0.0
    %1121 = vmatprep.subr.mxu0 0.0
    %1122 = vmatpush2.msra.mxu0 0.0
    %1123 = vmatprep.subr.mxu0 0.0
    %1124 = vmatpush2.msra.mxu0 0.0
    %1125 = vmatprep.subr.mxu0 0.0
    %1126 = vmatpush2.msra.mxu0 0.0
    %1127 = vmatprep.subr.mxu0 0.0
    %1128 = vmatpush2.msra.mxu0 0.0
    %1129 = vmatprep.subr.mxu0 0.0
    %1130 = vmatpush2.msra.mxu0 0.0
    %1131 = vmatprep.subr.mxu0 0.0
    %1132 = vmatpush2.msra.mxu0 0.0
    %1133 = vmatprep.subr.mxu0 0.0
    %1134 = vmatpush2.msra.mxu0 0.0
    %1135 = vmatprep.mubr.f32.mxu0 0.0
    %v1136 = vand.u32 %v1040, 4294901760
    %v1137 = vsub.f32 %v1040, %v1136
    %v1138 = vand.u32 %v1137, 4294901760
    %v1139 = vsub.f32 %v1137, %v1138
    %v1140 = vand.u32 %v1139, 4294901760
    %1141 = vmatmul.mubr.f32.gmra.mxu0 %v1140
    %v1142 = vpop.f32.mrf.mxu0
    %v1143 = vadd.f32 %v1001, %v1142
    %v1144 = vpop.f32.mrf.mxu0
    %1145 = vmatprep.mubr.f32.mxu0 0.0
    %v1146 = vand.u32 %v1043, 4294901760
    %v1147 = vsub.f32 %v1043, %v1146
    %v1148 = vand.u32 %v1147, 4294901760
    %v1149 = vsub.f32 %v1147, %v1148
    %v1150 = vand.u32 %v1149, 4294901760
    %1151 = vmatmul.mubr.f32.gmra.mxu0 %v1150
    %v1152 = vpop.f32.mrf.mxu0
    %v1153 = vadd.f32 %v1006, %v1152
    %v1154 = vpop.f32.mrf.mxu0
    %1155 = vmatprep.mubr.f32.mxu0 0.0
    %v1156 = vand.u32 %v1046, 4294901760
    %v1157 = vsub.f32 %v1046, %v1156
    %v1158 = vand.u32 %v1157, 4294901760
    %v1159 = vsub.f32 %v1157, %v1158
    %v1160 = vand.u32 %v1159, 4294901760
    %1161 = vmatmul.mubr.f32.gmra.mxu0 %v1160
    %v1162 = vpop.f32.mrf.mxu0
    %v1163 = vadd.f32 %v1011, %v1162
    %v1164 = vpop.f32.mrf.mxu0
    %1165 = vmatprep.mubr.f32.mxu0 0.0
    %v1166 = vand.u32 %v1049, 4294901760
    %v1167 = vsub.f32 %v1049, %v1166
    %v1168 = vand.u32 %v1167, 4294901760
    %v1169 = vsub.f32 %v1167, %v1168
    %v1170 = vand.u32 %v1169, 4294901760
    %1171 = vmatmul.mubr.f32.gmra.mxu0 %v1170
    %v1172 = vpop.f32.mrf.mxu0
    %v1173 = vadd.f32 %v1016, %v1172
    %v1174 = vpop.f32.mrf.mxu0
    %1175 = vmatprep.mubr.f32.mxu0 0.0
    %v1176 = vand.u32 %v1052, 4294901760
    %v1177 = vsub.f32 %v1052, %v1176
    %v1178 = vand.u32 %v1177, 4294901760
    %v1179 = vsub.f32 %v1177, %v1178
    %v1180 = vand.u32 %v1179, 4294901760
    %1181 = vmatmul.mubr.f32.gmra.mxu0 %v1180
    %v1182 = vpop.f32.mrf.mxu0
    %v1183 = vadd.f32 %v1021, %v1182
    %v1184 = vpop.f32.mrf.mxu0
    %1185 = vmatprep.mubr.f32.mxu0 0.0
    %v1186 = vand.u32 %v1055, 4294901760
    %v1187 = vsub.f32 %v1055, %v1186
    %v1188 = vand.u32 %v1187, 4294901760
    %v1189 = vsub.f32 %v1187, %v1188
    %v1190 = vand.u32 %v1189, 4294901760
    %1191 = vmatmul.mubr.f32.gmra.mxu0 %v1190
    %v1192 = vpop.f32.mrf.mxu0
    %v1193 = vadd.f32 %v1026, %v1192
    %v1194 = vpop.f32.mrf.mxu0
    %1195 = vmatprep.mubr.f32.mxu0 0.0
    %v1196 = vand.u32 %v1058, 4294901760
    %v1197 = vsub.f32 %v1058, %v1196
    %v1198 = vand.u32 %v1197, 4294901760
    %v1199 = vsub.f32 %v1197, %v1198
    %v1200 = vand.u32 %v1199, 4294901760
    %1201 = vmatmul.mubr.f32.gmra.mxu0 %v1200
    %v1202 = vpop.f32.mrf.mxu0
    %v1203 = vadd.f32 %v1031, %v1202
    %v1204 = vpop.f32.mrf.mxu0
    %1205 = vmatprep.mubr.f32.mxu0 0.0
    %v1206 = vand.u32 %v1061, 4294901760
    %v1207 = vsub.f32 %v1061, %v1206
    %v1208 = vand.u32 %v1207, 4294901760
    %v1209 = vsub.f32 %v1207, %v1208
    %v1210 = vand.u32 %v1209, 4294901760
    %1211 = vmatmul.mubr.f32.gmra.mxu0 %v1210
    %v1212 = vpop.f32.mrf.mxu0
    %v1213 = vadd.f32 %v1036, %v1212
    %v1214 = vpop.f32.mrf.mxu0
    %1215 = vdwg.mxu0
    %1216 = vmatprep.subr.mxu0 0.0
    %1217 = vmatpush1.msra.mxu0 0.0
    %1218 = vmatprep.subr.mxu0 0.0
    %1219 = vmatpush1.msra.mxu0 0.0
    %1220 = vmatprep.subr.mxu0 0.0
    %1221 = vmatpush1.msra.mxu0 0.0
    %1222 = vmatprep.subr.mxu0 0.0
    %1223 = vmatpush1.msra.mxu0 0.0
    %1224 = vmatprep.subr.mxu0 0.0
    %1225 = vmatpush1.msra.mxu0 0.0
    %1226 = vmatprep.subr.mxu0 0.0
    %1227 = vmatpush1.msra.mxu0 0.0
    %1228 = vmatprep.subr.mxu0 0.0
    %1229 = vmatpush1.msra.mxu0 0.0
    %1230 = vmatprep.subr.mxu0 0.0
    %1231 = vmatpush1.msra.mxu0 0.0
    %1232 = vmatprep.subr.mxu0 0.0
    %v1233 = vand.u32 %v981, 4294901760
    %v1234 = vsub.f32 %v981, %v1233
    %v1235 = vand.u32 %v1234, 4294901760
    %v1236 = vsub.f32 %v1234, %v1235
    %v1237 = vand.u32 %v1236, 4294901760
    %1238 = vmatpush1.msra.mxu0 %v1237
    %1239 = vmatprep.subr.mxu0 0.0
    %v1240 = vand.u32 %v980, 4294901760
    %v1241 = vsub.f32 %v980, %v1240
    %v1242 = vand.u32 %v1241, 4294901760
    %v1243 = vsub.f32 %v1241, %v1242
    %v1244 = vand.u32 %v1243, 4294901760
    %1245 = vmatpush1.msra.mxu0 %v1244
    %1246 = vmatprep.subr.mxu0 0.0
    %v1247 = vand.u32 %v979, 4294901760
    %v1248 = vsub.f32 %v979, %v1247
    %v1249 = vand.u32 %v1248, 4294901760
    %v1250 = vsub.f32 %v1248, %v1249
    %v1251 = vand.u32 %v1250, 4294901760
    %1252 = vmatpush1.msra.mxu0 %v1251
    %1253 = vmatprep.subr.mxu0 0.0
    %v1254 = vand.u32 %v978, 4294901760
    %v1255 = vsub.f32 %v978, %v1254
    %v1256 = vand.u32 %v1255, 4294901760
    %v1257 = vsub.f32 %v1255, %v1256
    %v1258 = vand.u32 %v1257, 4294901760
    %1259 = vmatpush1.msra.mxu0 %v1258
    %1260 = vmatprep.subr.mxu0 0.0
    %v1261 = vand.u32 %v977, 4294901760
    %v1262 = vsub.f32 %v977, %v1261
    %v1263 = vand.u32 %v1262, 4294901760
    %v1264 = vsub.f32 %v1262, %v1263
    %v1265 = vand.u32 %v1264, 4294901760
    %1266 = vmatpush1.msra.mxu0 %v1265
    %1267 = vmatprep.subr.mxu0 0.0
    %v1268 = vand.u32 %v976, 4294901760
    %v1269 = vsub.f32 %v976, %v1268
    %v1270 = vand.u32 %v1269, 4294901760
    %v1271 = vsub.f32 %v1269, %v1270
    %v1272 = vand.u32 %v1271, 4294901760
    %1273 = vmatpush1.msra.mxu0 %v1272
    %1274 = vmatprep.subr.mxu0 0.0
    %v1275 = vand.u32 %v975, 4294901760
    %v1276 = vsub.f32 %v975, %v1275
    %v1277 = vand.u32 %v1276, 4294901760
    %v1278 = vsub.f32 %v1276, %v1277
    %v1279 = vand.u32 %v1278, 4294901760
    %1280 = vmatpush1.msra.mxu0 %v1279
    %1281 = vmatprep.subr.mxu0 0.0
    %v1282 = vand.u32 %v974, 4294901760
    %v1283 = vsub.f32 %v974, %v1282
    %v1284 = vand.u32 %v1283, 4294901760
    %v1285 = vsub.f32 %v1283, %v1284
    %v1286 = vand.u32 %v1285, 4294901760
    %1287 = vmatpush1.msra.mxu0 %v1286
    %1288 = vmatprep.subr.mxu0 0.0
    %1289 = vmatpush2.msra.mxu0 0.0
    %1290 = vmatprep.subr.mxu0 0.0
    %1291 = vmatpush2.msra.mxu0 0.0
    %1292 = vmatprep.subr.mxu0 0.0
    %1293 = vmatpush2.msra.mxu0 0.0
    %1294 = vmatprep.subr.mxu0 0.0
    %1295 = vmatpush2.msra.mxu0 0.0
    %1296 = vmatprep.subr.mxu0 0.0
    %1297 = vmatpush2.msra.mxu0 0.0
    %1298 = vmatprep.subr.mxu0 0.0
    %1299 = vmatpush2.msra.mxu0 0.0
    %1300 = vmatprep.subr.mxu0 0.0
    %1301 = vmatpush2.msra.mxu0 0.0
    %1302 = vmatprep.subr.mxu0 0.0
    %1303 = vmatpush2.msra.mxu0 0.0
    %1304 = vmatprep.subr.mxu0 0.0
    %1305 = vmatpush2.msra.mxu0 0.0
    %1306 = vmatprep.subr.mxu0 0.0
    %1307 = vmatpush2.msra.mxu0 0.0
    %1308 = vmatprep.subr.mxu0 0.0
    %1309 = vmatpush2.msra.mxu0 0.0
    %1310 = vmatprep.subr.mxu0 0.0
    %1311 = vmatpush2.msra.mxu0 0.0
    %1312 = vmatprep.subr.mxu0 0.0
    %1313 = vmatpush2.msra.mxu0 0.0
    %1314 = vmatprep.subr.mxu0 0.0
    %1315 = vmatpush2.msra.mxu0 0.0
    %1316 = vmatprep.subr.mxu0 0.0
    %1317 = vmatpush2.msra.mxu0 0.0
    %1318 = vmatprep.subr.mxu0 0.0
    %1319 = vmatpush2.msra.mxu0 0.0
    %1320 = vmatprep.mubr.f32.mxu0 0.0
    %v1321 = vand.u32 %v1040, 4294901760
    %1322 = vmatmul.mubr.f32.gmra.mxu0 %v1321
    %v1323 = vpop.f32.mrf.mxu0
    %v1324 = vadd.f32 %v1143, %v1323
    %v1325 = vpop.f32.mrf.mxu0
    %1326 = vmatprep.mubr.f32.mxu0 0.0
    %v1327 = vand.u32 %v1043, 4294901760
    %1328 = vmatmul.mubr.f32.gmra.mxu0 %v1327
    %v1329 = vpop.f32.mrf.mxu0
    %v1330 = vadd.f32 %v1153, %v1329
    %v1331 = vpop.f32.mrf.mxu0
    %1332 = vmatprep.mubr.f32.mxu0 0.0
    %v1333 = vand.u32 %v1046, 4294901760
    %1334 = vmatmul.mubr.f32.gmra.mxu0 %v1333
    %v1335 = vpop.f32.mrf.mxu0
    %v1336 = vadd.f32 %v1163, %v1335
    %v1337 = vpop.f32.mrf.mxu0
    %1338 = vmatprep.mubr.f32.mxu0 0.0
    %v1339 = vand.u32 %v1049, 4294901760
    %1340 = vmatmul.mubr.f32.gmra.mxu0 %v1339
    %v1341 = vpop.f32.mrf.mxu0
    %v1342 = vadd.f32 %v1173, %v1341
    %v1343 = vpop.f32.mrf.mxu0
    %1344 = vmatprep.mubr.f32.mxu0 0.0
    %v1345 = vand.u32 %v1052, 4294901760
    %1346 = vmatmul.mubr.f32.gmra.mxu0 %v1345
    %v1347 = vpop.f32.mrf.mxu0
    %v1348 = vadd.f32 %v1183, %v1347
    %v1349 = vpop.f32.mrf.mxu0
    %1350 = vmatprep.mubr.f32.mxu0 0.0
    %v1351 = vand.u32 %v1055, 4294901760
    %1352 = vmatmul.mubr.f32.gmra.mxu0 %v1351
    %v1353 = vpop.f32.mrf.mxu0
    %v1354 = vadd.f32 %v1193, %v1353
    %v1355 = vpop.f32.mrf.mxu0
    %1356 = vmatprep.mubr.f32.mxu0 0.0
    %v1357 = vand.u32 %v1058, 4294901760
    %1358 = vmatmul.mubr.f32.gmra.mxu0 %v1357
    %v1359 = vpop.f32.mrf.mxu0
    %v1360 = vadd.f32 %v1203, %v1359
    %v1361 = vpop.f32.mrf.mxu0
    %1362 = vmatprep.mubr.f32.mxu0 0.0
    %v1363 = vand.u32 %v1061, 4294901760
    %1364 = vmatmul.mubr.f32.gmra.mxu0 %v1363
    %v1365 = vpop.f32.mrf.mxu0
    %v1366 = vadd.f32 %v1213, %v1365
    %v1367 = vpop.f32.mrf.mxu0
    %1368 = vdwg.mxu0
    %1369 = vmatprep.subr.mxu0 0.0
    %1370 = vmatpush1.msra.mxu0 0.0
    %1371 = vmatprep.subr.mxu0 0.0
    %1372 = vmatpush1.msra.mxu0 0.0
    %1373 = vmatprep.subr.mxu0 0.0
    %1374 = vmatpush1.msra.mxu0 0.0
    %1375 = vmatprep.subr.mxu0 0.0
    %1376 = vmatpush1.msra.mxu0 0.0
    %1377 = vmatprep.subr.mxu0 0.0
    %1378 = vmatpush1.msra.mxu0 0.0
    %1379 = vmatprep.subr.mxu0 0.0
    %1380 = vmatpush1.msra.mxu0 0.0
    %1381 = vmatprep.subr.mxu0 0.0
    %1382 = vmatpush1.msra.mxu0 0.0
    %1383 = vmatprep.subr.mxu0 0.0
    %1384 = vmatpush1.msra.mxu0 0.0
    %1385 = vmatprep.subr.mxu0 0.0
    %v1386 = vand.u32 %v981, 4294901760
    %v1387 = vsub.f32 %v981, %v1386
    %1388 = vmatpush1.msra.mxu0 %v1387
    %1389 = vmatprep.subr.mxu0 0.0
    %v1390 = vand.u32 %v980, 4294901760
    %v1391 = vsub.f32 %v980, %v1390
    %1392 = vmatpush1.msra.mxu0 %v1391
    %1393 = vmatprep.subr.mxu0 0.0
    %v1394 = vand.u32 %v979, 4294901760
    %v1395 = vsub.f32 %v979, %v1394
    %1396 = vmatpush1.msra.mxu0 %v1395
    %1397 = vmatprep.subr.mxu0 0.0
    %v1398 = vand.u32 %v978, 4294901760
    %v1399 = vsub.f32 %v978, %v1398
    %1400 = vmatpush1.msra.mxu0 %v1399
    %1401 = vmatprep.subr.mxu0 0.0
    %v1402 = vand.u32 %v977, 4294901760
    %v1403 = vsub.f32 %v977, %v1402
    %1404 = vmatpush1.msra.mxu0 %v1403
    %1405 = vmatprep.subr.mxu0 0.0
    %v1406 = vand.u32 %v976, 4294901760
    %v1407 = vsub.f32 %v976, %v1406
    %1408 = vmatpush1.msra.mxu0 %v1407
    %1409 = vmatprep.subr.mxu0 0.0
    %v1410 = vand.u32 %v975, 4294901760
    %v1411 = vsub.f32 %v975, %v1410
    %1412 = vmatpush1.msra.mxu0 %v1411
    %1413 = vmatprep.subr.mxu0 0.0
    %v1414 = vand.u32 %v974, 4294901760
    %v1415 = vsub.f32 %v974, %v1414
    %1416 = vmatpush1.msra.mxu0 %v1415
    %1417 = vmatprep.subr.mxu0 0.0
    %1418 = vmatpush2.msra.mxu0 0.0
    %1419 = vmatprep.subr.mxu0 0.0
    %1420 = vmatpush2.msra.mxu0 0.0
    %1421 = vmatprep.subr.mxu0 0.0
    %1422 = vmatpush2.msra.mxu0 0.0
    %1423 = vmatprep.subr.mxu0 0.0
    %1424 = vmatpush2.msra.mxu0 0.0
    %1425 = vmatprep.subr.mxu0 0.0
    %1426 = vmatpush2.msra.mxu0 0.0
    %1427 = vmatprep.subr.mxu0 0.0
    %1428 = vmatpush2.msra.mxu0 0.0
    %1429 = vmatprep.subr.mxu0 0.0
    %1430 = vmatpush2.msra.mxu0 0.0
    %1431 = vmatprep.subr.mxu0 0.0
    %1432 = vmatpush2.msra.mxu0 0.0
    %1433 = vmatprep.subr.mxu0 0.0
    %1434 = vmatpush2.msra.mxu0 0.0
    %1435 = vmatprep.subr.mxu0 0.0
    %1436 = vmatpush2.msra.mxu0 0.0
    %1437 = vmatprep.subr.mxu0 0.0
    %1438 = vmatpush2.msra.mxu0 0.0
    %1439 = vmatprep.subr.mxu0 0.0
    %1440 = vmatpush2.msra.mxu0 0.0
    %1441 = vmatprep.subr.mxu0 0.0
    %1442 = vmatpush2.msra.mxu0 0.0
    %1443 = vmatprep.subr.mxu0 0.0
    %1444 = vmatpush2.msra.mxu0 0.0
    %1445 = vmatprep.subr.mxu0 0.0
    %1446 = vmatpush2.msra.mxu0 0.0
    %1447 = vmatprep.subr.mxu0 0.0
    %1448 = vmatpush2.msra.mxu0 0.0
    %1449 = vmatprep.mubr.f32.mxu0 0.0
    %v1450 = vand.u32 %v1040, 4294901760
    %v1451 = vsub.f32 %v1040, %v1450
    %1452 = vmatmul.mubr.f32.gmra.mxu0 %v1451
    %v1453 = vpop.f32.mrf.mxu0
    %v1454 = vadd.f32 %v1324, %v1453
    %v1455 = vpop.f32.mrf.mxu0
    %1456 = vmatprep.mubr.f32.mxu0 0.0
    %v1457 = vand.u32 %v1043, 4294901760
    %v1458 = vsub.f32 %v1043, %v1457
    %1459 = vmatmul.mubr.f32.gmra.mxu0 %v1458
    %v1460 = vpop.f32.mrf.mxu0
    %v1461 = vadd.f32 %v1330, %v1460
    %v1462 = vpop.f32.mrf.mxu0
    %1463 = vmatprep.mubr.f32.mxu0 0.0
    %v1464 = vand.u32 %v1046, 4294901760
    %v1465 = vsub.f32 %v1046, %v1464
    %1466 = vmatmul.mubr.f32.gmra.mxu0 %v1465
    %v1467 = vpop.f32.mrf.mxu0
    %v1468 = vadd.f32 %v1336, %v1467
    %v1469 = vpop.f32.mrf.mxu0
    %1470 = vmatprep.mubr.f32.mxu0 0.0
    %v1471 = vand.u32 %v1049, 4294901760
    %v1472 = vsub.f32 %v1049, %v1471
    %1473 = vmatmul.mubr.f32.gmra.mxu0 %v1472
    %v1474 = vpop.f32.mrf.mxu0
    %v1475 = vadd.f32 %v1342, %v1474
    %v1476 = vpop.f32.mrf.mxu0
    %1477 = vmatprep.mubr.f32.mxu0 0.0
    %v1478 = vand.u32 %v1052, 4294901760
    %v1479 = vsub.f32 %v1052, %v1478
    %1480 = vmatmul.mubr.f32.gmra.mxu0 %v1479
    %v1481 = vpop.f32.mrf.mxu0
    %v1482 = vadd.f32 %v1348, %v1481
    %v1483 = vpop.f32.mrf.mxu0
    %1484 = vmatprep.mubr.f32.mxu0 0.0
    %v1485 = vand.u32 %v1055, 4294901760
    %v1486 = vsub.f32 %v1055, %v1485
    %1487 = vmatmul.mubr.f32.gmra.mxu0 %v1486
    %v1488 = vpop.f32.mrf.mxu0
    %v1489 = vadd.f32 %v1354, %v1488
    %v1490 = vpop.f32.mrf.mxu0
    %1491 = vmatprep.mubr.f32.mxu0 0.0
    %v1492 = vand.u32 %v1058, 4294901760
    %v1493 = vsub.f32 %v1058, %v1492
    %1494 = vmatmul.mubr.f32.gmra.mxu0 %v1493
    %v1495 = vpop.f32.mrf.mxu0
    %v1496 = vadd.f32 %v1360, %v1495
    %v1497 = vpop.f32.mrf.mxu0
    %1498 = vmatprep.mubr.f32.mxu0 0.0
    %v1499 = vand.u32 %v1061, 4294901760
    %v1500 = vsub.f32 %v1061, %v1499
    %1501 = vmatmul.mubr.f32.gmra.mxu0 %v1500
    %v1502 = vpop.f32.mrf.mxu0
    %v1503 = vadd.f32 %v1366, %v1502
    %v1504 = vpop.f32.mrf.mxu0
    %1505 = vdwg.mxu0
    %1506 = vmatprep.subr.mxu0 0.0
    %1507 = vmatpush1.msra.mxu0 0.0
    %1508 = vmatprep.subr.mxu0 0.0
    %1509 = vmatpush1.msra.mxu0 0.0
    %1510 = vmatprep.subr.mxu0 0.0
    %1511 = vmatpush1.msra.mxu0 0.0
    %1512 = vmatprep.subr.mxu0 0.0
    %1513 = vmatpush1.msra.mxu0 0.0
    %1514 = vmatprep.subr.mxu0 0.0
    %1515 = vmatpush1.msra.mxu0 0.0
    %1516 = vmatprep.subr.mxu0 0.0
    %1517 = vmatpush1.msra.mxu0 0.0
    %1518 = vmatprep.subr.mxu0 0.0
    %1519 = vmatpush1.msra.mxu0 0.0
    %1520 = vmatprep.subr.mxu0 0.0
    %1521 = vmatpush1.msra.mxu0 0.0
    %1522 = vmatprep.subr.mxu0 0.0
    %v1523 = vand.u32 %v981, 4294901760
    %1524 = vmatpush1.msra.mxu0 %v1523
    %1525 = vmatprep.subr.mxu0 0.0
    %v1526 = vand.u32 %v980, 4294901760
    %1527 = vmatpush1.msra.mxu0 %v1526
    %1528 = vmatprep.subr.mxu0 0.0
    %v1529 = vand.u32 %v979, 4294901760
    %1530 = vmatpush1.msra.mxu0 %v1529
    %1531 = vmatprep.subr.mxu0 0.0
    %v1532 = vand.u32 %v978, 4294901760
    %1533 = vmatpush1.msra.mxu0 %v1532
    %1534 = vmatprep.subr.mxu0 0.0
    %v1535 = vand.u32 %v977, 4294901760
    %1536 = vmatpush1.msra.mxu0 %v1535
    %1537 = vmatprep.subr.mxu0 0.0
    %v1538 = vand.u32 %v976, 4294901760
    %1539 = vmatpush1.msra.mxu0 %v1538
    %1540 = vmatprep.subr.mxu0 0.0
    %v1541 = vand.u32 %v975, 4294901760
    %1542 = vmatpush1.msra.mxu0 %v1541
    %1543 = vmatprep.subr.mxu0 0.0
    %v1544 = vand.u32 %v974, 4294901760
    %1545 = vmatpush1.msra.mxu0 %v1544
    %1546 = vmatprep.subr.mxu0 0.0
    %1547 = vmatpush2.msra.mxu0 0.0
    %1548 = vmatprep.subr.mxu0 0.0
    %1549 = vmatpush2.msra.mxu0 0.0
    %1550 = vmatprep.subr.mxu0 0.0
    %1551 = vmatpush2.msra.mxu0 0.0
    %1552 = vmatprep.subr.mxu0 0.0
    %1553 = vmatpush2.msra.mxu0 0.0
    %1554 = vmatprep.subr.mxu0 0.0
    %1555 = vmatpush2.msra.mxu0 0.0
    %1556 = vmatprep.subr.mxu0 0.0
    %1557 = vmatpush2.msra.mxu0 0.0
    %1558 = vmatprep.subr.mxu0 0.0
    %1559 = vmatpush2.msra.mxu0 0.0
    %1560 = vmatprep.subr.mxu0 0.0
    %1561 = vmatpush2.msra.mxu0 0.0
    %1562 = vmatprep.subr.mxu0 0.0
    %1563 = vmatpush2.msra.mxu0 0.0
    %1564 = vmatprep.subr.mxu0 0.0
    %1565 = vmatpush2.msra.mxu0 0.0
    %1566 = vmatprep.subr.mxu0 0.0
    %1567 = vmatpush2.msra.mxu0 0.0
    %1568 = vmatprep.subr.mxu0 0.0
    %1569 = vmatpush2.msra.mxu0 0.0
    %1570 = vmatprep.subr.mxu0 0.0
    %1571 = vmatpush2.msra.mxu0 0.0
    %1572 = vmatprep.subr.mxu0 0.0
    %1573 = vmatpush2.msra.mxu0 0.0
    %1574 = vmatprep.subr.mxu0 0.0
    %1575 = vmatpush2.msra.mxu0 0.0
    %1576 = vmatprep.subr.mxu0 0.0
    %1577 = vmatpush2.msra.mxu0 0.0
    %1578 = vmatprep.mubr.f32.mxu0 0.0
    %v1579 = vand.u32 %v1040, 4294901760
    %v1580 = vsub.f32 %v1040, %v1579
    %v1581 = vand.u32 %v1580, 4294901760
    %1582 = vmatmul.mubr.f32.gmra.mxu0 %v1581
    %v1583 = vpop.f32.mrf.mxu0
    %v1584 = vadd.f32 %v1454, %v1583
    %v1585 = vpop.f32.mrf.mxu0
    %1586 = vmatprep.mubr.f32.mxu0 0.0
    %v1587 = vand.u32 %v1043, 4294901760
    %v1588 = vsub.f32 %v1043, %v1587
    %v1589 = vand.u32 %v1588, 4294901760
    %1590 = vmatmul.mubr.f32.gmra.mxu0 %v1589
    %v1591 = vpop.f32.mrf.mxu0
    %v1592 = vadd.f32 %v1461, %v1591
    %v1593 = vpop.f32.mrf.mxu0
    %1594 = vmatprep.mubr.f32.mxu0 0.0
    %v1595 = vand.u32 %v1046, 4294901760
    %v1596 = vsub.f32 %v1046, %v1595
    %v1597 = vand.u32 %v1596, 4294901760
    %1598 = vmatmul.mubr.f32.gmra.mxu0 %v1597
    %v1599 = vpop.f32.mrf.mxu0
    %v1600 = vadd.f32 %v1468, %v1599
    %v1601 = vpop.f32.mrf.mxu0
    %1602 = vmatprep.mubr.f32.mxu0 0.0
    %v1603 = vand.u32 %v1049, 4294901760
    %v1604 = vsub.f32 %v1049, %v1603
    %v1605 = vand.u32 %v1604, 4294901760
    %1606 = vmatmul.mubr.f32.gmra.mxu0 %v1605
    %v1607 = vpop.f32.mrf.mxu0
    %v1608 = vadd.f32 %v1475, %v1607
    %v1609 = vpop.f32.mrf.mxu0
    %1610 = vmatprep.mubr.f32.mxu0 0.0
    %v1611 = vand.u32 %v1052, 4294901760
    %v1612 = vsub.f32 %v1052, %v1611
    %v1613 = vand.u32 %v1612, 4294901760
    %1614 = vmatmul.mubr.f32.gmra.mxu0 %v1613
    %v1615 = vpop.f32.mrf.mxu0
    %v1616 = vadd.f32 %v1482, %v1615
    %v1617 = vpop.f32.mrf.mxu0
    %1618 = vmatprep.mubr.f32.mxu0 0.0
    %v1619 = vand.u32 %v1055, 4294901760
    %v1620 = vsub.f32 %v1055, %v1619
    %v1621 = vand.u32 %v1620, 4294901760
    %1622 = vmatmul.mubr.f32.gmra.mxu0 %v1621
    %v1623 = vpop.f32.mrf.mxu0
    %v1624 = vadd.f32 %v1489, %v1623
    %v1625 = vpop.f32.mrf.mxu0
    %1626 = vmatprep.mubr.f32.mxu0 0.0
    %v1627 = vand.u32 %v1058, 4294901760
    %v1628 = vsub.f32 %v1058, %v1627
    %v1629 = vand.u32 %v1628, 4294901760
    %1630 = vmatmul.mubr.f32.gmra.mxu0 %v1629
    %v1631 = vpop.f32.mrf.mxu0
    %v1632 = vadd.f32 %v1496, %v1631
    %v1633 = vpop.f32.mrf.mxu0
    %1634 = vmatprep.mubr.f32.mxu0 0.0
    %v1635 = vand.u32 %v1061, 4294901760
    %v1636 = vsub.f32 %v1061, %v1635
    %v1637 = vand.u32 %v1636, 4294901760
    %1638 = vmatmul.mubr.f32.gmra.mxu0 %v1637
    %v1639 = vpop.f32.mrf.mxu0
    %v1640 = vadd.f32 %v1503, %v1639
    %v1641 = vpop.f32.mrf.mxu0
    %1642 = vdwg.mxu0
    %1643 = vmatprep.subr.mxu0 0.0
    %1644 = vmatpush1.msra.mxu0 0.0
    %1645 = vmatprep.subr.mxu0 0.0
    %1646 = vmatpush1.msra.mxu0 0.0
    %1647 = vmatprep.subr.mxu0 0.0
    %1648 = vmatpush1.msra.mxu0 0.0
    %1649 = vmatprep.subr.mxu0 0.0
    %1650 = vmatpush1.msra.mxu0 0.0
    %1651 = vmatprep.subr.mxu0 0.0
    %1652 = vmatpush1.msra.mxu0 0.0
    %1653 = vmatprep.subr.mxu0 0.0
    %1654 = vmatpush1.msra.mxu0 0.0
    %1655 = vmatprep.subr.mxu0 0.0
    %1656 = vmatpush1.msra.mxu0 0.0
    %1657 = vmatprep.subr.mxu0 0.0
    %1658 = vmatpush1.msra.mxu0 0.0
    %1659 = vmatprep.subr.mxu0 0.0
    %v1660 = vand.u32 %v981, 4294901760
    %v1661 = vsub.f32 %v981, %v1660
    %v1662 = vand.u32 %v1661, 4294901760
    %1663 = vmatpush1.msra.mxu0 %v1662
    %1664 = vmatprep.subr.mxu0 0.0
    %v1665 = vand.u32 %v980, 4294901760
    %v1666 = vsub.f32 %v980, %v1665
    %v1667 = vand.u32 %v1666, 4294901760
    %1668 = vmatpush1.msra.mxu0 %v1667
    %1669 = vmatprep.subr.mxu0 0.0
    %v1670 = vand.u32 %v979, 4294901760
    %v1671 = vsub.f32 %v979, %v1670
    %v1672 = vand.u32 %v1671, 4294901760
    %1673 = vmatpush1.msra.mxu0 %v1672
    %1674 = vmatprep.subr.mxu0 0.0
    %v1675 = vand.u32 %v978, 4294901760
    %v1676 = vsub.f32 %v978, %v1675
    %v1677 = vand.u32 %v1676, 4294901760
    %1678 = vmatpush1.msra.mxu0 %v1677
    %1679 = vmatprep.subr.mxu0 0.0
    %v1680 = vand.u32 %v977, 4294901760
    %v1681 = vsub.f32 %v977, %v1680
    %v1682 = vand.u32 %v1681, 4294901760
    %1683 = vmatpush1.msra.mxu0 %v1682
    %1684 = vmatprep.subr.mxu0 0.0
    %v1685 = vand.u32 %v976, 4294901760
    %v1686 = vsub.f32 %v976, %v1685
    %v1687 = vand.u32 %v1686, 4294901760
    %1688 = vmatpush1.msra.mxu0 %v1687
    %1689 = vmatprep.subr.mxu0 0.0
    %v1690 = vand.u32 %v975, 4294901760
    %v1691 = vsub.f32 %v975, %v1690
    %v1692 = vand.u32 %v1691, 4294901760
    %1693 = vmatpush1.msra.mxu0 %v1692
    %1694 = vmatprep.subr.mxu0 0.0
    %v1695 = vand.u32 %v974, 4294901760
    %v1696 = vsub.f32 %v974, %v1695
    %v1697 = vand.u32 %v1696, 4294901760
    %1698 = vmatpush1.msra.mxu0 %v1697
    %1699 = vmatprep.subr.mxu0 0.0
    %1700 = vmatpush2.msra.mxu0 0.0
    %1701 = vmatprep.subr.mxu0 0.0
    %1702 = vmatpush2.msra.mxu0 0.0
    %1703 = vmatprep.subr.mxu0 0.0
    %1704 = vmatpush2.msra.mxu0 0.0
    %1705 = vmatprep.subr.mxu0 0.0
    %1706 = vmatpush2.msra.mxu0 0.0
    %1707 = vmatprep.subr.mxu0 0.0
    %1708 = vmatpush2.msra.mxu0 0.0
    %1709 = vmatprep.subr.mxu0 0.0
    %1710 = vmatpush2.msra.mxu0 0.0
    %1711 = vmatprep.subr.mxu0 0.0
    %1712 = vmatpush2.msra.mxu0 0.0
    %1713 = vmatprep.subr.mxu0 0.0
    %1714 = vmatpush2.msra.mxu0 0.0
    %1715 = vmatprep.subr.mxu0 0.0
    %1716 = vmatpush2.msra.mxu0 0.0
    %1717 = vmatprep.subr.mxu0 0.0
    %1718 = vmatpush2.msra.mxu0 0.0
    %1719 = vmatprep.subr.mxu0 0.0
    %1720 = vmatpush2.msra.mxu0 0.0
    %1721 = vmatprep.subr.mxu0 0.0
    %1722 = vmatpush2.msra.mxu0 0.0
    %1723 = vmatprep.subr.mxu0 0.0
    %1724 = vmatpush2.msra.mxu0 0.0
    %1725 = vmatprep.subr.mxu0 0.0
    %1726 = vmatpush2.msra.mxu0 0.0
    %1727 = vmatprep.subr.mxu0 0.0
    %1728 = vmatpush2.msra.mxu0 0.0
    %1729 = vmatprep.subr.mxu0 0.0
    %1730 = vmatpush2.msra.mxu0 0.0
    %1731 = vmatprep.mubr.f32.mxu0 0.0
    %v1732 = vand.u32 %v1040, 4294901760
    %1733 = vmatmul.mubr.f32.gmra.mxu0 %v1732
    %v1734 = vpop.f32.mrf.mxu0
    %v1735 = vadd.f32 %v1584, %v1734
    %v1736 = vpop.f32.mrf.mxu0
    %1737 = vmatprep.mubr.f32.mxu0 0.0
    %v1738 = vand.u32 %v1043, 4294901760
    %1739 = vmatmul.mubr.f32.gmra.mxu0 %v1738
    %v1740 = vpop.f32.mrf.mxu0
    %v1741 = vadd.f32 %v1592, %v1740
    %v1742 = vpop.f32.mrf.mxu0
    %1743 = vmatprep.mubr.f32.mxu0 0.0
    %v1744 = vand.u32 %v1046, 4294901760
    %1745 = vmatmul.mubr.f32.gmra.mxu0 %v1744
    %v1746 = vpop.f32.mrf.mxu0
    %v1747 = vadd.f32 %v1600, %v1746
    %v1748 = vpop.f32.mrf.mxu0
    %1749 = vmatprep.mubr.f32.mxu0 0.0
    %v1750 = vand.u32 %v1049, 4294901760
    %1751 = vmatmul.mubr.f32.gmra.mxu0 %v1750
    %v1752 = vpop.f32.mrf.mxu0
    %v1753 = vadd.f32 %v1608, %v1752
    %v1754 = vpop.f32.mrf.mxu0
    %1755 = vmatprep.mubr.f32.mxu0 0.0
    %v1756 = vand.u32 %v1052, 4294901760
    %1757 = vmatmul.mubr.f32.gmra.mxu0 %v1756
    %v1758 = vpop.f32.mrf.mxu0
    %v1759 = vadd.f32 %v1616, %v1758
    %v1760 = vpop.f32.mrf.mxu0
    %1761 = vmatprep.mubr.f32.mxu0 0.0
    %v1762 = vand.u32 %v1055, 4294901760
    %1763 = vmatmul.mubr.f32.gmra.mxu0 %v1762
    %v1764 = vpop.f32.mrf.mxu0
    %v1765 = vadd.f32 %v1624, %v1764
    %v1766 = vpop.f32.mrf.mxu0
    %1767 = vmatprep.mubr.f32.mxu0 0.0
    %v1768 = vand.u32 %v1058, 4294901760
    %1769 = vmatmul.mubr.f32.gmra.mxu0 %v1768
    %v1770 = vpop.f32.mrf.mxu0
    %v1771 = vadd.f32 %v1632, %v1770
    %v1772 = vpop.f32.mrf.mxu0
    %1773 = vmatprep.mubr.f32.mxu0 0.0
    %v1774 = vand.u32 %v1061, 4294901760
    %1775 = vmatmul.mubr.f32.gmra.mxu0 %v1774
    %v1776 = vpop.f32.mrf.mxu0
    %v1777 = vadd.f32 %v1640, %v1776
    %v1778 = vpop.f32.mrf.mxu0
    %1779 = vdwg.mxu0
    %1780 = vmatprep.subr.mxu0 0.0
    %1781 = vmatpush1.msra.mxu0 0.0
    %1782 = vmatprep.subr.mxu0 0.0
    %1783 = vmatpush1.msra.mxu0 0.0
    %1784 = vmatprep.subr.mxu0 0.0
    %1785 = vmatpush1.msra.mxu0 0.0
    %1786 = vmatprep.subr.mxu0 0.0
    %1787 = vmatpush1.msra.mxu0 0.0
    %1788 = vmatprep.subr.mxu0 0.0
    %1789 = vmatpush1.msra.mxu0 0.0
    %1790 = vmatprep.subr.mxu0 0.0
    %1791 = vmatpush1.msra.mxu0 0.0
    %1792 = vmatprep.subr.mxu0 0.0
    %1793 = vmatpush1.msra.mxu0 0.0
    %1794 = vmatprep.subr.mxu0 0.0
    %1795 = vmatpush1.msra.mxu0 0.0
    %1796 = vmatprep.subr.mxu0 0.0
    %v1797 = vand.u32 %v981, 4294901760
    %1798 = vmatpush1.msra.mxu0 %v1797
    %1799 = vmatprep.subr.mxu0 0.0
    %v1800 = vand.u32 %v980, 4294901760
    %1801 = vmatpush1.msra.mxu0 %v1800
    %1802 = vmatprep.subr.mxu0 0.0
    %v1803 = vand.u32 %v979, 4294901760
    %1804 = vmatpush1.msra.mxu0 %v1803
    %1805 = vmatprep.subr.mxu0 0.0
    %v1806 = vand.u32 %v978, 4294901760
    %1807 = vmatpush1.msra.mxu0 %v1806
    %1808 = vmatprep.subr.mxu0 0.0
    %v1809 = vand.u32 %v977, 4294901760
    %1810 = vmatpush1.msra.mxu0 %v1809
    %1811 = vmatprep.subr.mxu0 0.0
    %v1812 = vand.u32 %v976, 4294901760
    %1813 = vmatpush1.msra.mxu0 %v1812
    %1814 = vmatprep.subr.mxu0 0.0
    %v1815 = vand.u32 %v975, 4294901760
    %1816 = vmatpush1.msra.mxu0 %v1815
    %1817 = vmatprep.subr.mxu0 0.0
    %v1818 = vand.u32 %v974, 4294901760
    %1819 = vmatpush1.msra.mxu0 %v1818
    %1820 = vmatprep.subr.mxu0 0.0
    %1821 = vmatpush2.msra.mxu0 0.0
    %1822 = vmatprep.subr.mxu0 0.0
    %1823 = vmatpush2.msra.mxu0 0.0
    %1824 = vmatprep.subr.mxu0 0.0
    %1825 = vmatpush2.msra.mxu0 0.0
    %1826 = vmatprep.subr.mxu0 0.0
    %1827 = vmatpush2.msra.mxu0 0.0
    %1828 = vmatprep.subr.mxu0 0.0
    %1829 = vmatpush2.msra.mxu0 0.0
    %1830 = vmatprep.subr.mxu0 0.0
    %1831 = vmatpush2.msra.mxu0 0.0
    %1832 = vmatprep.subr.mxu0 0.0
    %1833 = vmatpush2.msra.mxu0 0.0
    %1834 = vmatprep.subr.mxu0 0.0
    %1835 = vmatpush2.msra.mxu0 0.0
    %1836 = vmatprep.subr.mxu0 0.0
    %1837 = vmatpush2.msra.mxu0 0.0
    %1838 = vmatprep.subr.mxu0 0.0
    %1839 = vmatpush2.msra.mxu0 0.0
    %1840 = vmatprep.subr.mxu0 0.0
    %1841 = vmatpush2.msra.mxu0 0.0
    %1842 = vmatprep.subr.mxu0 0.0
    %1843 = vmatpush2.msra.mxu0 0.0
    %1844 = vmatprep.subr.mxu0 0.0
    %1845 = vmatpush2.msra.mxu0 0.0
    %1846 = vmatprep.subr.mxu0 0.0
    %1847 = vmatpush2.msra.mxu0 0.0
    %1848 = vmatprep.subr.mxu0 0.0
    %1849 = vmatpush2.msra.mxu0 0.0
    %1850 = vmatprep.subr.mxu0 0.0
    %1851 = vmatpush2.msra.mxu0 0.0
    %1852 = vmatprep.mubr.f32.mxu0 0.0
    %v1853 = vand.u32 %v1040, 4294901760
    %1854 = vmatmul.mubr.f32.gmra.mxu0 %v1853
    %v1855 = vpop.f32.mrf.mxu0
    %v1856 = vadd.f32 %v1735, %v1855
    %v1857 = vpop.f32.mrf.mxu0
    %1858 = vmatprep.mubr.f32.mxu0 0.0
    %v1859 = vand.u32 %v1043, 4294901760
    %1860 = vmatmul.mubr.f32.gmra.mxu0 %v1859
    %v1861 = vpop.f32.mrf.mxu0
    %v1862 = vadd.f32 %v1741, %v1861
    %v1863 = vpop.f32.mrf.mxu0
    %1864 = vmatprep.mubr.f32.mxu0 0.0
    %v1865 = vand.u32 %v1046, 4294901760
    %1866 = vmatmul.mubr.f32.gmra.mxu0 %v1865
    %v1867 = vpop.f32.mrf.mxu0
    %v1868 = vadd.f32 %v1747, %v1867
    %v1869 = vpop.f32.mrf.mxu0
    %1870 = vmatprep.mubr.f32.mxu0 0.0
    %v1871 = vand.u32 %v1049, 4294901760
    %1872 = vmatmul.mubr.f32.gmra.mxu0 %v1871
    %v1873 = vpop.f32.mrf.mxu0
    %v1874 = vadd.f32 %v1753, %v1873
    %v1875 = vpop.f32.mrf.mxu0
    %1876 = vmatprep.mubr.f32.mxu0 0.0
    %v1877 = vand.u32 %v1052, 4294901760
    %1878 = vmatmul.mubr.f32.gmra.mxu0 %v1877
    %v1879 = vpop.f32.mrf.mxu0
    %v1880 = vadd.f32 %v1759, %v1879
    %v1881 = vpop.f32.mrf.mxu0
    %1882 = vmatprep.mubr.f32.mxu0 0.0
    %v1883 = vand.u32 %v1055, 4294901760
    %1884 = vmatmul.mubr.f32.gmra.mxu0 %v1883
    %v1885 = vpop.f32.mrf.mxu0
    %v1886 = vadd.f32 %v1765, %v1885
    %v1887 = vpop.f32.mrf.mxu0
    %1888 = vmatprep.mubr.f32.mxu0 0.0
    %v1889 = vand.u32 %v1058, 4294901760
    %1890 = vmatmul.mubr.f32.gmra.mxu0 %v1889
    %v1891 = vpop.f32.mrf.mxu0
    %v1892 = vadd.f32 %v1771, %v1891
    %v1893 = vpop.f32.mrf.mxu0
    %1894 = vmatprep.mubr.f32.mxu0 0.0
    %v1895 = vand.u32 %v1061, 4294901760
    %1896 = vmatmul.mubr.f32.gmra.mxu0 %v1895
    %v1897 = vpop.f32.mrf.mxu0
    %v1898 = vadd.f32 %v1777, %v1897
    %v1899 = vpop.f32.mrf.mxu0
    %1900 = vdwg.mxu0
    %v1901 = vmax.f32 %v1856, 0.0
    %v1902 = vmax.f32 %v1862, 0.0
    %v1903 = vmax.f32 %v1868, 0.0
    %v1904 = vmax.f32 %v1874, 0.0
    %v1905 = vmax.f32 %v1880, 0.0
    %v1906 = vmax.f32 %v1886, 0.0
    %v1907 = vmax.f32 %v1892, 0.0
    %v1908 = vmax.f32 %v1898, 0.0
    %v1909 = vand.u32 2147483647, %v1856
    %v1910 = vand.u32 2147483647, %v1862
    %v1911 = vand.u32 2147483647, %v1868
    %v1912 = vand.u32 2147483647, %v1874
    %v1913 = vand.u32 2147483647, %v1880
    %v1914 = vand.u32 2147483647, %v1886
    %v1915 = vand.u32 2147483647, %v1892
    %v1916 = vand.u32 2147483647, %v1898
    %v1917 = vsub.f32 0.0, %v1909
    %v1918 = vsub.f32 0.0, %v1910
    %v1919 = vsub.f32 0.0, %v1911
    %v1920 = vsub.f32 0.0, %v1912
    %v1921 = vsub.f32 0.0, %v1913
    %v1922 = vsub.f32 0.0, %v1914
    %v1923 = vsub.f32 0.0, %v1915
    %v1924 = vsub.f32 0.0, %v1916
    %v1925 = vmul.f32 %v1917, 1.442695
    %v1926 = vpow.pop %v1925
    %v1927 = vmul.f32 %v1918, 1.442695
    %v1928 = vpow.pop %v1927
    %v1929 = vmul.f32 %v1919, 1.442695
    %v1930 = vpow.pop %v1929
    %v1931 = vmul.f32 %v1920, 1.442695
    %v1932 = vpow.pop %v1931
    %v1933 = vmul.f32 %v1921, 1.442695
    %v1934 = vpow.pop %v1933
    %v1935 = vmul.f32 %v1922, 1.442695
    %v1936 = vpow.pop %v1935
    %v1937 = vmul.f32 %v1923, 1.442695
    %v1938 = vpow.pop %v1937
    %v1939 = vmul.f32 %v1924, 1.442695
    %v1940 = vpow.pop %v1939
    %v1941 = vadd.f32 %v1926, 1.0
    %v1942 = vlog2.pop %v1941
    %v1943 = vmul.f32 %v1942, 0.6931472
    %v1944 = vmul.f32 -0.5, %v1926
    %v1945 = vadd.f32 %v1944, 1.0
    %v1946 = vmul.f32 %v1945, %v1926
    %v1947 = vand.u32 2147483647, %v1926
    %vm1948 = vcmp.lt.f32.partialorder %v1947, 0.0004427343
    %v1949 = vsel %vm1948, %v1946, %v1943
    %v1950 = vadd.f32 %v1928, 1.0
    %v1951 = vlog2.pop %v1950
    %v1952 = vmul.f32 %v1951, 0.6931472
    %v1953 = vmul.f32 -0.5, %v1928
    %v1954 = vadd.f32 %v1953, 1.0
    %v1955 = vmul.f32 %v1954, %v1928
    %v1956 = vand.u32 2147483647, %v1928
    %vm1957 = vcmp.lt.f32.partialorder %v1956, 0.0004427343
    %v1958 = vsel %vm1957, %v1955, %v1952
    %v1959 = vadd.f32 %v1930, 1.0
    %v1960 = vlog2.pop %v1959
    %v1961 = vmul.f32 %v1960, 0.6931472
    %v1962 = vmul.f32 -0.5, %v1930
    %v1963 = vadd.f32 %v1962, 1.0
    %v1964 = vmul.f32 %v1963, %v1930
    %v1965 = vand.u32 2147483647, %v1930
    %vm1966 = vcmp.lt.f32.partialorder %v1965, 0.0004427343
    %v1967 = vsel %vm1966, %v1964, %v1961
    %v1968 = vadd.f32 %v1932, 1.0
    %v1969 = vlog2.pop %v1968
    %v1970 = vmul.f32 %v1969, 0.6931472
    %v1971 = vmul.f32 -0.5, %v1932
    %v1972 = vadd.f32 %v1971, 1.0
    %v1973 = vmul.f32 %v1972, %v1932
    %v1974 = vand.u32 2147483647, %v1932
    %vm1975 = vcmp.lt.f32.partialorder %v1974, 0.0004427343
    %v1976 = vsel %vm1975, %v1973, %v1970
    %v1977 = vadd.f32 %v1934, 1.0
    %v1978 = vlog2.pop %v1977
    %v1979 = vmul.f32 %v1978, 0.6931472
    %v1980 = vmul.f32 -0.5, %v1934
    %v1981 = vadd.f32 %v1980, 1.0
    %v1982 = vmul.f32 %v1981, %v1934
    %v1983 = vand.u32 2147483647, %v1934
    %vm1984 = vcmp.lt.f32.partialorder %v1983, 0.0004427343
    %v1985 = vsel %vm1984, %v1982, %v1979
    %v1986 = vadd.f32 %v1936, 1.0
    %v1987 = vlog2.pop %v1986
    %v1988 = vmul.f32 %v1987, 0.6931472
    %v1989 = vmul.f32 -0.5, %v1936
    %v1990 = vadd.f32 %v1989, 1.0
    %v1991 = vmul.f32 %v1990, %v1936
    %v1992 = vand.u32 2147483647, %v1936
    %vm1993 = vcmp.lt.f32.partialorder %v1992, 0.0004427343
    %v1994 = vsel %vm1993, %v1991, %v1988
    %v1995 = vadd.f32 %v1938, 1.0
    %v1996 = vlog2.pop %v1995
    %v1997 = vmul.f32 %v1996, 0.6931472
    %v1998 = vmul.f32 -0.5, %v1938
    %v1999 = vadd.f32 %v1998, 1.0
    %v2000 = vmul.f32 %v1999, %v1938
    %v2001 = vand.u32 2147483647, %v1938
    %vm2002 = vcmp.lt.f32.partialorder %v2001, 0.0004427343
    %v2003 = vsel %vm2002, %v2000, %v1997
    %v2004 = vadd.f32 %v1940, 1.0
    %v2005 = vlog2.pop %v2004
    %v2006 = vmul.f32 %v2005, 0.6931472
    %v2007 = vmul.f32 -0.5, %v1940
    %v2008 = vadd.f32 %v2007, 1.0
    %v2009 = vmul.f32 %v2008, %v1940
    %v2010 = vand.u32 2147483647, %v1940
    %vm2011 = vcmp.lt.f32.partialorder %v2010, 0.0004427343
    %v2012 = vsel %vm2011, %v2009, %v2006
    %v2013 = vadd.f32 %v1901, %v1949
    %v2014 = vadd.f32 %v1902, %v1958
    %v2015 = vadd.f32 %v1903, %v1967
    %v2016 = vadd.f32 %v1904, %v1976
    %v2017 = vadd.f32 %v1905, %v1985
    %v2018 = vadd.f32 %v1906, %v1994
    %v2019 = vadd.f32 %v1907, %v2003
    %v2020 = vadd.f32 %v1908, %v2012
    %v2021 = vld [vmem:[%s5] sm:$0x1]
    %v2022 = vld [vmem:[#allocation2] sm:$0x1]
    %2024 = vset.pattern.permute.xlu0 0
    %2025 = vperm.xlu0 %2024, %v2022
    %v2026 = vpop.permute.xlu0 %2025
    %v2028 = vlaneseq
    %v2029 = vshrl.u32 %v2028, 7
    %v2030 = vsub.s32 0, %v2029
    %v2031 = vrot.slane %v2026, %v2030
    %v2033 = vsel %vm1038, %v2021, 0
    %2035 = vmatprep.subr.mxu0 0.0
    %2036 = vmatpush1.msra.mxu0 0.0
    %2037 = vmatprep.subr.mxu0 0.0
    %2038 = vmatpush1.msra.mxu0 0.0
    %2039 = vmatprep.subr.mxu0 0.0
    %2040 = vmatpush1.msra.mxu0 0.0
    %2041 = vmatprep.subr.mxu0 0.0
    %2042 = vmatpush1.msra.mxu0 0.0
    %2043 = vmatprep.subr.mxu0 0.0
    %2044 = vmatpush1.msra.mxu0 0.0
    %2045 = vmatprep.subr.mxu0 0.0
    %2046 = vmatpush1.msra.mxu0 0.0
    %2047 = vmatprep.subr.mxu0 0.0
    %2048 = vmatpush1.msra.mxu0 0.0
    %2049 = vmatprep.subr.mxu0 0.0
    %2050 = vmatpush1.msra.mxu0 0.0
    %2051 = vmatprep.subr.mxu0 0.0
    %v2052 = vand.u32 %v2020, 4294901760
    %2053 = vmatpush1.msra.mxu0 %v2052
    %2054 = vmatprep.subr.mxu0 0.0
    %v2055 = vand.u32 %v2019, 4294901760
    %2056 = vmatpush1.msra.mxu0 %v2055
    %2057 = vmatprep.subr.mxu0 0.0
    %v2058 = vand.u32 %v2018, 4294901760
    %2059 = vmatpush1.msra.mxu0 %v2058
    %2060 = vmatprep.subr.mxu0 0.0
    %v2061 = vand.u32 %v2017, 4294901760
    %2062 = vmatpush1.msra.mxu0 %v2061
    %2063 = vmatprep.subr.mxu0 0.0
    %v2064 = vand.u32 %v2016, 4294901760
    %2065 = vmatpush1.msra.mxu0 %v2064
    %2066 = vmatprep.subr.mxu0 0.0
    %v2067 = vand.u32 %v2015, 4294901760
    %2068 = vmatpush1.msra.mxu0 %v2067
    %2069 = vmatprep.subr.mxu0 0.0
    %v2070 = vand.u32 %v2014, 4294901760
    %2071 = vmatpush1.msra.mxu0 %v2070
    %2072 = vmatprep.subr.mxu0 0.0
    %v2073 = vand.u32 %v2013, 4294901760
    %2074 = vmatpush1.msra.mxu0 %v2073
    %2075 = vmatprep.subr.mxu0 0.0
    %2076 = vmatpush2.msra.mxu0 0.0
    %2077 = vmatprep.subr.mxu0 0.0
    %2078 = vmatpush2.msra.mxu0 0.0
    %2079 = vmatprep.subr.mxu0 0.0
    %2080 = vmatpush2.msra.mxu0 0.0
    %2081 = vmatprep.subr.mxu0 0.0
    %2082 = vmatpush2.msra.mxu0 0.0
    %2083 = vmatprep.subr.mxu0 0.0
    %2084 = vmatpush2.msra.mxu0 0.0
    %2085 = vmatprep.subr.mxu0 0.0
    %2086 = vmatpush2.msra.mxu0 0.0
    %2087 = vmatprep.subr.mxu0 0.0
    %2088 = vmatpush2.msra.mxu0 0.0
    %2089 = vmatprep.subr.mxu0 0.0
    %2090 = vmatpush2.msra.mxu0 0.0
    %2091 = vmatprep.subr.mxu0 0.0
    %2092 = vmatpush2.msra.mxu0 0.0
    %2093 = vmatprep.subr.mxu0 0.0
    %2094 = vmatpush2.msra.mxu0 0.0
    %2095 = vmatprep.subr.mxu0 0.0
    %2096 = vmatpush2.msra.mxu0 0.0
    %2097 = vmatprep.subr.mxu0 0.0
    %2098 = vmatpush2.msra.mxu0 0.0
    %2099 = vmatprep.subr.mxu0 0.0
    %2100 = vmatpush2.msra.mxu0 0.0
    %2101 = vmatprep.subr.mxu0 0.0
    %2102 = vmatpush2.msra.mxu0 0.0
    %2103 = vmatprep.subr.mxu0 0.0
    %2104 = vmatpush2.msra.mxu0 0.0
    %2105 = vmatprep.subr.mxu0 0.0
    %2106 = vmatpush2.msra.mxu0 0.0
    %2107 = vmatprep.mubr.f32.mxu0 0.0
    %v2108 = vand.u32 %v2033, 4294901760
    %v2109 = vsub.f32 %v2033, %v2108
    %v2110 = vand.u32 %v2109, 4294901760
    %v2111 = vsub.f32 %v2109, %v2110
    %v2112 = vand.u32 %v2111, 4294901760
    %2113 = vmatmul.mubr.f32.gmra.mxu0 %v2112
    %v2114 = vpop.f32.mrf.mxu0
    %v2115 = vadd.f32 %v2031, %v2114
    %v2116 = vpop.f32.mrf.mxu0
    %2117 = vdwg.mxu0
    %2118 = vmatprep.subr.mxu0 0.0
    %2119 = vmatpush1.msra.mxu0 0.0
    %2120 = vmatprep.subr.mxu0 0.0
    %2121 = vmatpush1.msra.mxu0 0.0
    %2122 = vmatprep.subr.mxu0 0.0
    %2123 = vmatpush1.msra.mxu0 0.0
    %2124 = vmatprep.subr.mxu0 0.0
    %2125 = vmatpush1.msra.mxu0 0.0
    %2126 = vmatprep.subr.mxu0 0.0
    %2127 = vmatpush1.msra.mxu0 0.0
    %2128 = vmatprep.subr.mxu0 0.0
    %2129 = vmatpush1.msra.mxu0 0.0
    %2130 = vmatprep.subr.mxu0 0.0
    %2131 = vmatpush1.msra.mxu0 0.0
    %2132 = vmatprep.subr.mxu0 0.0
    %2133 = vmatpush1.msra.mxu0 0.0
    %2134 = vmatprep.subr.mxu0 0.0
    %v2135 = vand.u32 %v2020, 4294901760
    %v2136 = vsub.f32 %v2020, %v2135
    %v2137 = vand.u32 %v2136, 4294901760
    %v2138 = vsub.f32 %v2136, %v2137
    %v2139 = vand.u32 %v2138, 4294901760
    %2140 = vmatpush1.msra.mxu0 %v2139
    %2141 = vmatprep.subr.mxu0 0.0
    %v2142 = vand.u32 %v2019, 4294901760
    %v2143 = vsub.f32 %v2019, %v2142
    %v2144 = vand.u32 %v2143, 4294901760
    %v2145 = vsub.f32 %v2143, %v2144
    %v2146 = vand.u32 %v2145, 4294901760
    %2147 = vmatpush1.msra.mxu0 %v2146
    %2148 = vmatprep.subr.mxu0 0.0
    %v2149 = vand.u32 %v2018, 4294901760
    %v2150 = vsub.f32 %v2018, %v2149
    %v2151 = vand.u32 %v2150, 4294901760
    %v2152 = vsub.f32 %v2150, %v2151
    %v2153 = vand.u32 %v2152, 4294901760
    %2154 = vmatpush1.msra.mxu0 %v2153
    %2155 = vmatprep.subr.mxu0 0.0
    %v2156 = vand.u32 %v2017, 4294901760
    %v2157 = vsub.f32 %v2017, %v2156
    %v2158 = vand.u32 %v2157, 4294901760
    %v2159 = vsub.f32 %v2157, %v2158
    %v2160 = vand.u32 %v2159, 4294901760
    %2161 = vmatpush1.msra.mxu0 %v2160
    %2162 = vmatprep.subr.mxu0 0.0
    %v2163 = vand.u32 %v2016, 4294901760
    %v2164 = vsub.f32 %v2016, %v2163
    %v2165 = vand.u32 %v2164, 4294901760
    %v2166 = vsub.f32 %v2164, %v2165
    %v2167 = vand.u32 %v2166, 4294901760
    %2168 = vmatpush1.msra.mxu0 %v2167
    %2169 = vmatprep.subr.mxu0 0.0
    %v2170 = vand.u32 %v2015, 4294901760
    %v2171 = vsub.f32 %v2015, %v2170
    %v2172 = vand.u32 %v2171, 4294901760
    %v2173 = vsub.f32 %v2171, %v2172
    %v2174 = vand.u32 %v2173, 4294901760
    %2175 = vmatpush1.msra.mxu0 %v2174
    %2176 = vmatprep.subr.mxu0 0.0
    %v2177 = vand.u32 %v2014, 4294901760
    %v2178 = vsub.f32 %v2014, %v2177
    %v2179 = vand.u32 %v2178, 4294901760
    %v2180 = vsub.f32 %v2178, %v2179
    %v2181 = vand.u32 %v2180, 4294901760
    %2182 = vmatpush1.msra.mxu0 %v2181
    %2183 = vmatprep.subr.mxu0 0.0
    %v2184 = vand.u32 %v2013, 4294901760
    %v2185 = vsub.f32 %v2013, %v2184
    %v2186 = vand.u32 %v2185, 4294901760
    %v2187 = vsub.f32 %v2185, %v2186
    %v2188 = vand.u32 %v2187, 4294901760
    %2189 = vmatpush1.msra.mxu0 %v2188
    %2190 = vmatprep.subr.mxu0 0.0
    %2191 = vmatpush2.msra.mxu0 0.0
    %2192 = vmatprep.subr.mxu0 0.0
    %2193 = vmatpush2.msra.mxu0 0.0
    %2194 = vmatprep.subr.mxu0 0.0
    %2195 = vmatpush2.msra.mxu0 0.0
    %2196 = vmatprep.subr.mxu0 0.0
    %2197 = vmatpush2.msra.mxu0 0.0
    %2198 = vmatprep.subr.mxu0 0.0
    %2199 = vmatpush2.msra.mxu0 0.0
    %2200 = vmatprep.subr.mxu0 0.0
    %2201 = vmatpush2.msra.mxu0 0.0
    %2202 = vmatprep.subr.mxu0 0.0
    %2203 = vmatpush2.msra.mxu0 0.0
    %2204 = vmatprep.subr.mxu0 0.0
    %2205 = vmatpush2.msra.mxu0 0.0
    %2206 = vmatprep.subr.mxu0 0.0
    %2207 = vmatpush2.msra.mxu0 0.0
    %2208 = vmatprep.subr.mxu0 0.0
    %2209 = vmatpush2.msra.mxu0 0.0
    %2210 = vmatprep.subr.mxu0 0.0
    %2211 = vmatpush2.msra.mxu0 0.0
    %2212 = vmatprep.subr.mxu0 0.0
    %2213 = vmatpush2.msra.mxu0 0.0
    %2214 = vmatprep.subr.mxu0 0.0
    %2215 = vmatpush2.msra.mxu0 0.0
    %2216 = vmatprep.subr.mxu0 0.0
    %2217 = vmatpush2.msra.mxu0 0.0
    %2218 = vmatprep.subr.mxu0 0.0
    %2219 = vmatpush2.msra.mxu0 0.0
    %2220 = vmatprep.subr.mxu0 0.0
    %2221 = vmatpush2.msra.mxu0 0.0
    %2222 = vmatprep.mubr.f32.mxu0 0.0
    %v2223 = vand.u32 %v2033, 4294901760
    %2224 = vmatmul.mubr.f32.gmra.mxu0 %v2223
    %v2225 = vpop.f32.mrf.mxu0
    %v2226 = vadd.f32 %v2115, %v2225
    %v2227 = vpop.f32.mrf.mxu0
    %2228 = vdwg.mxu0
    %2229 = vmatprep.subr.mxu0 0.0
    %2230 = vmatpush1.msra.mxu0 0.0
    %2231 = vmatprep.subr.mxu0 0.0
    %2232 = vmatpush1.msra.mxu0 0.0
    %2233 = vmatprep.subr.mxu0 0.0
    %2234 = vmatpush1.msra.mxu0 0.0
    %2235 = vmatprep.subr.mxu0 0.0
    %2236 = vmatpush1.msra.mxu0 0.0
    %2237 = vmatprep.subr.mxu0 0.0
    %2238 = vmatpush1.msra.mxu0 0.0
    %2239 = vmatprep.subr.mxu0 0.0
    %2240 = vmatpush1.msra.mxu0 0.0
    %2241 = vmatprep.subr.mxu0 0.0
    %2242 = vmatpush1.msra.mxu0 0.0
    %2243 = vmatprep.subr.mxu0 0.0
    %2244 = vmatpush1.msra.mxu0 0.0
    %2245 = vmatprep.subr.mxu0 0.0
    %v2246 = vand.u32 %v2020, 4294901760
    %v2247 = vsub.f32 %v2020, %v2246
    %2248 = vmatpush1.msra.mxu0 %v2247
    %2249 = vmatprep.subr.mxu0 0.0
    %v2250 = vand.u32 %v2019, 4294901760
    %v2251 = vsub.f32 %v2019, %v2250
    %2252 = vmatpush1.msra.mxu0 %v2251
    %2253 = vmatprep.subr.mxu0 0.0
    %v2254 = vand.u32 %v2018, 4294901760
    %v2255 = vsub.f32 %v2018, %v2254
    %2256 = vmatpush1.msra.mxu0 %v2255
    %2257 = vmatprep.subr.mxu0 0.0
    %v2258 = vand.u32 %v2017, 4294901760
    %v2259 = vsub.f32 %v2017, %v2258
    %2260 = vmatpush1.msra.mxu0 %v2259
    %2261 = vmatprep.subr.mxu0 0.0
    %v2262 = vand.u32 %v2016, 4294901760
    %v2263 = vsub.f32 %v2016, %v2262
    %2264 = vmatpush1.msra.mxu0 %v2263
    %2265 = vmatprep.subr.mxu0 0.0
    %v2266 = vand.u32 %v2015, 4294901760
    %v2267 = vsub.f32 %v2015, %v2266
    %2268 = vmatpush1.msra.mxu0 %v2267
    %2269 = vmatprep.subr.mxu0 0.0
    %v2270 = vand.u32 %v2014, 4294901760
    %v2271 = vsub.f32 %v2014, %v2270
    %2272 = vmatpush1.msra.mxu0 %v2271
    %2273 = vmatprep.subr.mxu0 0.0
    %v2274 = vand.u32 %v2013, 4294901760
    %v2275 = vsub.f32 %v2013, %v2274
    %2276 = vmatpush1.msra.mxu0 %v2275
    %2277 = vmatprep.subr.mxu0 0.0
    %2278 = vmatpush2.msra.mxu0 0.0
    %2279 = vmatprep.subr.mxu0 0.0
    %2280 = vmatpush2.msra.mxu0 0.0
    %2281 = vmatprep.subr.mxu0 0.0
    %2282 = vmatpush2.msra.mxu0 0.0
    %2283 = vmatprep.subr.mxu0 0.0
    %2284 = vmatpush2.msra.mxu0 0.0
    %2285 = vmatprep.subr.mxu0 0.0
    %2286 = vmatpush2.msra.mxu0 0.0
    %2287 = vmatprep.subr.mxu0 0.0
    %2288 = vmatpush2.msra.mxu0 0.0
    %2289 = vmatprep.subr.mxu0 0.0
    %2290 = vmatpush2.msra.mxu0 0.0
    %2291 = vmatprep.subr.mxu0 0.0
    %2292 = vmatpush2.msra.mxu0 0.0
    %2293 = vmatprep.subr.mxu0 0.0
    %2294 = vmatpush2.msra.mxu0 0.0
    %2295 = vmatprep.subr.mxu0 0.0
    %2296 = vmatpush2.msra.mxu0 0.0
    %2297 = vmatprep.subr.mxu0 0.0
    %2298 = vmatpush2.msra.mxu0 0.0
    %2299 = vmatprep.subr.mxu0 0.0
    %2300 = vmatpush2.msra.mxu0 0.0
    %2301 = vmatprep.subr.mxu0 0.0
    %2302 = vmatpush2.msra.mxu0 0.0
    %2303 = vmatprep.subr.mxu0 0.0
    %2304 = vmatpush2.msra.mxu0 0.0
    %2305 = vmatprep.subr.mxu0 0.0
    %2306 = vmatpush2.msra.mxu0 0.0
    %2307 = vmatprep.subr.mxu0 0.0
    %2308 = vmatpush2.msra.mxu0 0.0
    %2309 = vmatprep.mubr.f32.mxu0 0.0
    %v2310 = vand.u32 %v2033, 4294901760
    %v2311 = vsub.f32 %v2033, %v2310
    %2312 = vmatmul.mubr.f32.gmra.mxu0 %v2311
    %v2313 = vpop.f32.mrf.mxu0
    %v2314 = vadd.f32 %v2226, %v2313
    %v2315 = vpop.f32.mrf.mxu0
    %2316 = vdwg.mxu0
    %2317 = vmatprep.subr.mxu0 0.0
    %2318 = vmatpush1.msra.mxu0 0.0
    %2319 = vmatprep.subr.mxu0 0.0
    %2320 = vmatpush1.msra.mxu0 0.0
    %2321 = vmatprep.subr.mxu0 0.0
    %2322 = vmatpush1.msra.mxu0 0.0
    %2323 = vmatprep.subr.mxu0 0.0
    %2324 = vmatpush1.msra.mxu0 0.0
    %2325 = vmatprep.subr.mxu0 0.0
    %2326 = vmatpush1.msra.mxu0 0.0
    %2327 = vmatprep.subr.mxu0 0.0
    %2328 = vmatpush1.msra.mxu0 0.0
    %2329 = vmatprep.subr.mxu0 0.0
    %2330 = vmatpush1.msra.mxu0 0.0
    %2331 = vmatprep.subr.mxu0 0.0
    %2332 = vmatpush1.msra.mxu0 0.0
    %2333 = vmatprep.subr.mxu0 0.0
    %v2334 = vand.u32 %v2020, 4294901760
    %2335 = vmatpush1.msra.mxu0 %v2334
    %2336 = vmatprep.subr.mxu0 0.0
    %v2337 = vand.u32 %v2019, 4294901760
    %2338 = vmatpush1.msra.mxu0 %v2337
    %2339 = vmatprep.subr.mxu0 0.0
    %v2340 = vand.u32 %v2018, 4294901760
    %2341 = vmatpush1.msra.mxu0 %v2340
    %2342 = vmatprep.subr.mxu0 0.0
    %v2343 = vand.u32 %v2017, 4294901760
    %2344 = vmatpush1.msra.mxu0 %v2343
    %2345 = vmatprep.subr.mxu0 0.0
    %v2346 = vand.u32 %v2016, 4294901760
    %2347 = vmatpush1.msra.mxu0 %v2346
    %2348 = vmatprep.subr.mxu0 0.0
    %v2349 = vand.u32 %v2015, 4294901760
    %2350 = vmatpush1.msra.mxu0 %v2349
    %2351 = vmatprep.subr.mxu0 0.0
    %v2352 = vand.u32 %v2014, 4294901760
    %2353 = vmatpush1.msra.mxu0 %v2352
    %2354 = vmatprep.subr.mxu0 0.0
    %v2355 = vand.u32 %v2013, 4294901760
    %2356 = vmatpush1.msra.mxu0 %v2355
    %2357 = vmatprep.subr.mxu0 0.0
    %2358 = vmatpush2.msra.mxu0 0.0
    %2359 = vmatprep.subr.mxu0 0.0
    %2360 = vmatpush2.msra.mxu0 0.0
    %2361 = vmatprep.subr.mxu0 0.0
    %2362 = vmatpush2.msra.mxu0 0.0
    %2363 = vmatprep.subr.mxu0 0.0
    %2364 = vmatpush2.msra.mxu0 0.0
    %2365 = vmatprep.subr.mxu0 0.0
    %2366 = vmatpush2.msra.mxu0 0.0
    %2367 = vmatprep.subr.mxu0 0.0
    %2368 = vmatpush2.msra.mxu0 0.0
    %2369 = vmatprep.subr.mxu0 0.0
    %2370 = vmatpush2.msra.mxu0 0.0
    %2371 = vmatprep.subr.mxu0 0.0
    %2372 = vmatpush2.msra.mxu0 0.0
    %2373 = vmatprep.subr.mxu0 0.0
    %2374 = vmatpush2.msra.mxu0 0.0
    %2375 = vmatprep.subr.mxu0 0.0
    %2376 = vmatpush2.msra.mxu0 0.0
    %2377 = vmatprep.subr.mxu0 0.0
    %2378 = vmatpush2.msra.mxu0 0.0
    %2379 = vmatprep.subr.mxu0 0.0
    %2380 = vmatpush2.msra.mxu0 0.0
    %2381 = vmatprep.subr.mxu0 0.0
    %2382 = vmatpush2.msra.mxu0 0.0
    %2383 = vmatprep.subr.mxu0 0.0
    %2384 = vmatpush2.msra.mxu0 0.0
    %2385 = vmatprep.subr.mxu0 0.0
    %2386 = vmatpush2.msra.mxu0 0.0
    %2387 = vmatprep.subr.mxu0 0.0
    %2388 = vmatpush2.msra.mxu0 0.0
    %2389 = vmatprep.mubr.f32.mxu0 0.0
    %v2390 = vand.u32 %v2033, 4294901760
    %v2391 = vsub.f32 %v2033, %v2390
    %v2392 = vand.u32 %v2391, 4294901760
    %2393 = vmatmul.mubr.f32.gmra.mxu0 %v2392
    %v2394 = vpop.f32.mrf.mxu0
    %v2395 = vadd.f32 %v2314, %v2394
    %v2396 = vpop.f32.mrf.mxu0
    %2397 = vdwg.mxu0
    %2398 = vmatprep.subr.mxu0 0.0
    %2399 = vmatpush1.msra.mxu0 0.0
    %2400 = vmatprep.subr.mxu0 0.0
    %2401 = vmatpush1.msra.mxu0 0.0
    %2402 = vmatprep.subr.mxu0 0.0
    %2403 = vmatpush1.msra.mxu0 0.0
    %2404 = vmatprep.subr.mxu0 0.0
    %2405 = vmatpush1.msra.mxu0 0.0
    %2406 = vmatprep.subr.mxu0 0.0
    %2407 = vmatpush1.msra.mxu0 0.0
    %2408 = vmatprep.subr.mxu0 0.0
    %2409 = vmatpush1.msra.mxu0 0.0
    %2410 = vmatprep.subr.mxu0 0.0
    %2411 = vmatpush1.msra.mxu0 0.0
    %2412 = vmatprep.subr.mxu0 0.0
    %2413 = vmatpush1.msra.mxu0 0.0
    %2414 = vmatprep.subr.mxu0 0.0
    %v2415 = vand.u32 %v2020, 4294901760
    %v2416 = vsub.f32 %v2020, %v2415
    %v2417 = vand.u32 %v2416, 4294901760
    %2418 = vmatpush1.msra.mxu0 %v2417
    %2419 = vmatprep.subr.mxu0 0.0
    %v2420 = vand.u32 %v2019, 4294901760
    %v2421 = vsub.f32 %v2019, %v2420
    %v2422 = vand.u32 %v2421, 4294901760
    %2423 = vmatpush1.msra.mxu0 %v2422
    %2424 = vmatprep.subr.mxu0 0.0
    %v2425 = vand.u32 %v2018, 4294901760
    %v2426 = vsub.f32 %v2018, %v2425
    %v2427 = vand.u32 %v2426, 4294901760
    %2428 = vmatpush1.msra.mxu0 %v2427
    %2429 = vmatprep.subr.mxu0 0.0
    %v2430 = vand.u32 %v2017, 4294901760
    %v2431 = vsub.f32 %v2017, %v2430
    %v2432 = vand.u32 %v2431, 4294901760
    %2433 = vmatpush1.msra.mxu0 %v2432
    %2434 = vmatprep.subr.mxu0 0.0
    %v2435 = vand.u32 %v2016, 4294901760
    %v2436 = vsub.f32 %v2016, %v2435
    %v2437 = vand.u32 %v2436, 4294901760
    %2438 = vmatpush1.msra.mxu0 %v2437
    %2439 = vmatprep.subr.mxu0 0.0
    %v2440 = vand.u32 %v2015, 4294901760
    %v2441 = vsub.f32 %v2015, %v2440
    %v2442 = vand.u32 %v2441, 4294901760
    %2443 = vmatpush1.msra.mxu0 %v2442
    %2444 = vmatprep.subr.mxu0 0.0
    %v2445 = vand.u32 %v2014, 4294901760
    %v2446 = vsub.f32 %v2014, %v2445
    %v2447 = vand.u32 %v2446, 4294901760
    %2448 = vmatpush1.msra.mxu0 %v2447
    %2449 = vmatprep.subr.mxu0 0.0
    %v2450 = vand.u32 %v2013, 4294901760
    %v2451 = vsub.f32 %v2013, %v2450
    %v2452 = vand.u32 %v2451, 4294901760
    %2453 = vmatpush1.msra.mxu0 %v2452
    %2454 = vmatprep.subr.mxu0 0.0
    %2455 = vmatpush2.msra.mxu0 0.0
    %2456 = vmatprep.subr.mxu0 0.0
    %2457 = vmatpush2.msra.mxu0 0.0
    %2458 = vmatprep.subr.mxu0 0.0
    %2459 = vmatpush2.msra.mxu0 0.0
    %2460 = vmatprep.subr.mxu0 0.0
    %2461 = vmatpush2.msra.mxu0 0.0
    %2462 = vmatprep.subr.mxu0 0.0
    %2463 = vmatpush2.msra.mxu0 0.0
    %2464 = vmatprep.subr.mxu0 0.0
    %2465 = vmatpush2.msra.mxu0 0.0
    %2466 = vmatprep.subr.mxu0 0.0
    %2467 = vmatpush2.msra.mxu0 0.0
    %2468 = vmatprep.subr.mxu0 0.0
    %2469 = vmatpush2.msra.mxu0 0.0
    %2470 = vmatprep.subr.mxu0 0.0
    %2471 = vmatpush2.msra.mxu0 0.0
    %2472 = vmatprep.subr.mxu0 0.0
    %2473 = vmatpush2.msra.mxu0 0.0
    %2474 = vmatprep.subr.mxu0 0.0
    %2475 = vmatpush2.msra.mxu0 0.0
    %2476 = vmatprep.subr.mxu0 0.0
    %2477 = vmatpush2.msra.mxu0 0.0
    %2478 = vmatprep.subr.mxu0 0.0
    %2479 = vmatpush2.msra.mxu0 0.0
    %2480 = vmatprep.subr.mxu0 0.0
    %2481 = vmatpush2.msra.mxu0 0.0
    %2482 = vmatprep.subr.mxu0 0.0
    %2483 = vmatpush2.msra.mxu0 0.0
    %2484 = vmatprep.subr.mxu0 0.0
    %2485 = vmatpush2.msra.mxu0 0.0
    %2486 = vmatprep.mubr.f32.mxu0 0.0
    %v2487 = vand.u32 %v2033, 4294901760
    %2488 = vmatmul.mubr.f32.gmra.mxu0 %v2487
    %v2489 = vpop.f32.mrf.mxu0
    %v2490 = vadd.f32 %v2395, %v2489
    %v2491 = vpop.f32.mrf.mxu0
    %2492 = vdwg.mxu0
    %2493 = vmatprep.subr.mxu0 0.0
    %2494 = vmatpush1.msra.mxu0 0.0
    %2495 = vmatprep.subr.mxu0 0.0
    %2496 = vmatpush1.msra.mxu0 0.0
    %2497 = vmatprep.subr.mxu0 0.0
    %2498 = vmatpush1.msra.mxu0 0.0
    %2499 = vmatprep.subr.mxu0 0.0
    %2500 = vmatpush1.msra.mxu0 0.0
    %2501 = vmatprep.subr.mxu0 0.0
    %2502 = vmatpush1.msra.mxu0 0.0
    %2503 = vmatprep.subr.mxu0 0.0
    %2504 = vmatpush1.msra.mxu0 0.0
    %2505 = vmatprep.subr.mxu0 0.0
    %2506 = vmatpush1.msra.mxu0 0.0
    %2507 = vmatprep.subr.mxu0 0.0
    %2508 = vmatpush1.msra.mxu0 0.0
    %2509 = vmatprep.subr.mxu0 0.0
    %v2510 = vand.u32 %v2020, 4294901760
    %2511 = vmatpush1.msra.mxu0 %v2510
    %2512 = vmatprep.subr.mxu0 0.0
    %v2513 = vand.u32 %v2019, 4294901760
    %2514 = vmatpush1.msra.mxu0 %v2513
    %2515 = vmatprep.subr.mxu0 0.0
    %v2516 = vand.u32 %v2018, 4294901760
    %2517 = vmatpush1.msra.mxu0 %v2516
    %2518 = vmatprep.subr.mxu0 0.0
    %v2519 = vand.u32 %v2017, 4294901760
    %2520 = vmatpush1.msra.mxu0 %v2519
    %2521 = vmatprep.subr.mxu0 0.0
    %v2522 = vand.u32 %v2016, 4294901760
    %2523 = vmatpush1.msra.mxu0 %v2522
    %2524 = vmatprep.subr.mxu0 0.0
    %v2525 = vand.u32 %v2015, 4294901760
    %2526 = vmatpush1.msra.mxu0 %v2525
    %2527 = vmatprep.subr.mxu0 0.0
    %v2528 = vand.u32 %v2014, 4294901760
    %2529 = vmatpush1.msra.mxu0 %v2528
    %2530 = vmatprep.subr.mxu0 0.0
    %v2531 = vand.u32 %v2013, 4294901760
    %2532 = vmatpush1.msra.mxu0 %v2531
    %2533 = vmatprep.subr.mxu0 0.0
    %2534 = vmatpush2.msra.mxu0 0.0
    %2535 = vmatprep.subr.mxu0 0.0
    %2536 = vmatpush2.msra.mxu0 0.0
    %2537 = vmatprep.subr.mxu0 0.0
    %2538 = vmatpush2.msra.mxu0 0.0
    %2539 = vmatprep.subr.mxu0 0.0
    %2540 = vmatpush2.msra.mxu0 0.0
    %2541 = vmatprep.subr.mxu0 0.0
    %2542 = vmatpush2.msra.mxu0 0.0
    %2543 = vmatprep.subr.mxu0 0.0
    %2544 = vmatpush2.msra.mxu0 0.0
    %2545 = vmatprep.subr.mxu0 0.0
    %2546 = vmatpush2.msra.mxu0 0.0
    %2547 = vmatprep.subr.mxu0 0.0
    %2548 = vmatpush2.msra.mxu0 0.0
    %2549 = vmatprep.subr.mxu0 0.0
    %2550 = vmatpush2.msra.mxu0 0.0
    %2551 = vmatprep.subr.mxu0 0.0
    %2552 = vmatpush2.msra.mxu0 0.0
    %2553 = vmatprep.subr.mxu0 0.0
    %2554 = vmatpush2.msra.mxu0 0.0
    %2555 = vmatprep.subr.mxu0 0.0
    %2556 = vmatpush2.msra.mxu0 0.0
    %2557 = vmatprep.subr.mxu0 0.0
    %2558 = vmatpush2.msra.mxu0 0.0
    %2559 = vmatprep.subr.mxu0 0.0
    %2560 = vmatpush2.msra.mxu0 0.0
    %2561 = vmatprep.subr.mxu0 0.0
    %2562 = vmatpush2.msra.mxu0 0.0
    %2563 = vmatprep.subr.mxu0 0.0
    %2564 = vmatpush2.msra.mxu0 0.0
    %2565 = vmatprep.mubr.f32.mxu0 0.0
    %v2566 = vand.u32 %v2033, 4294901760
    %2567 = vmatmul.mubr.f32.gmra.mxu0 %v2566
    %v2568 = vpop.f32.mrf.mxu0
    %v2569 = vadd.f32 %v2490, %v2568
    %v2570 = vpop.f32.mrf.mxu0
    %2571 = vdwg.mxu0
    %2572 = vst [vmem:[#allocation3] sm:$0x1] %v2569
    // Predicated region
    $region30: #{tpu_custom_call.1} parent=1 // pred_check
      _
    $region31: #{tpu_custom_call.1} parent=1 // pred_check_branch
      %2574 = sbr.rel (0) target = $region33
    $region32: #{tpu_custom_call.1} parent=1 // pred_region
      %s2576 = ssub.s32 16, 16
      %2577 = vsyncadd [#allocation4], %s2576
      %s2579 = sshll.u32 [#allocation3], 4
      %s2580 = int_to_ptr.vmem [resolvable:$true] %s2579
      %2582 = dma.vmem_to_hbm [thread:$0]  %s2580, 16, %s7, [#allocation4]
    $region33: #{tpu_custom_call.1} parent=1 // pred_fallthru
      _
    // Predicated region
    $region34: #{tpu_custom_call.1} parent=1 // pred_check
      _
    $region35: #{tpu_custom_call.1} parent=1 // pred_check_branch
      %2584 = sbr.rel (0) target = $region37
    $region36: #{tpu_custom_call.1} parent=1 // pred_region
      %2585 = dma.done [#allocation4], 16
    $region37: #{tpu_custom_call.1} parent=1 // pred_fallthru
      _
    %2586 = vsyncpa [#allocation4], 1

</llo_original>
